<compile_context>
chip_gen: v7x
topology: tpu7x:2x2x1
jax: 0.10.0
libtpu: 0.0.40
codegen_flags: <defaults>
</compile_context>

<pallas_src>
import functools

import jax
import jax.numpy as jnp
from jax.experimental import pallas as pl
from jax.experimental.pallas import tpu as pltpu


# ---------------------------------------------------------------------------
# In-kernel activations: exp + reciprocal both on the EUP slot (VALU relief).
# ---------------------------------------------------------------------------
def _sigmoid_k(v):
    return pl.reciprocal(1.0 + jnp.exp(-v), approx=True)


def _silu_k(v):
    return v * _sigmoid_k(v)


# ---------------------------------------------------------------------------
# Kernel: a chain of MBConv blocks for ONE sample (grid axis = batch, parallel).
# Lane-dense layout: activations are (H, W*C); 1x1 convs are block-diagonal MXU
# matmuls; depthwise conv is XLU rolls + boundary masks; SE stays on VPU/XLU.
# ---------------------------------------------------------------------------
def mbconv_chain_kernel(x_ref,        # (H, W*Cin)              f32 lane-dense input (this sample)
                        w1_ref,       # (NB, W*Cin, W*Cexp)     bf16 block-diag expand weights (BN folded)
                        b1_ref,       # (NB, 1, W*Cexp)         f32 folded bias, lane-tiled
                        wdw_ref,      # (NB, k*k, W*Cexp)       f32 tap weights, BN + x-boundary mask folded
                        bdw_ref,      # (NB, 1, W*Cexp)
                        rowm_ref,     # (H, k)                  f32 y-boundary masks per tap row (shared)
                        wse1t_ref,    # (NB, Csq, Cexp)         f32 SE squeeze weights (transposed)
                        bse1_ref,     # (NB, 1, Csq)
                        wse2t_ref,    # (NB, Csq, W*Cexp)       f32 SE expand weights, lane-tiled
                        bse2t_ref,    # (NB, 1, W*Cexp)
                        w3_ref,       # (NB, W*Cexp, W*Cout)    bf16 block-diag project weights (BN folded)
                        b3_ref,       # (NB, 1, W*Cout)
                        o_ref,        # (H, W*Cout)
                        *, n_blocks, h, w, cexp, csq, ksize, use_res):
    rows = h
    lanes = w * cexp
    pad = (ksize - 1) // 2
    center = pad * ksize + pad
    rowm = rowm_ref[...]                                        # (H, k), shared across blocks

    cur = x_ref[...]                                            # (H, W*Cin) f32
    for blk in range(n_blocks):
        # ---- 1x1 expand conv (+folded BN) + SiLU: block-diag MXU matmul, bf16 in / f32 acc
        hact = jnp.dot(cur.astype(jnp.bfloat16), w1_ref[blk],
                       preferred_element_type=jnp.float32)
        hact = _silu_k(hact + b1_ref[blk])                      # (H, lanes)

        # ---- depthwise kxk conv (stride 1, 'same'): XLU rolls + boundary masks
        wdw = wdw_ref[blk]                                      # (k*k, lanes), single load
        acc = hact * wdw[center:center + 1, :]                  # center tap init (no masks needed)
        for dy in range(ksize):
            oy = dy - pad
            if oy == 0:
                hy = hact                                       # oy==0: rows all valid, skip mask
            else:
                hy = pltpu.roll(hact, shift=(-oy) % rows, axis=0)
                hy = hy * rowm[:, dy:dy + 1]                    # zero rows whose source fell outside
            for dx in range(ksize):
                ox = dx - pad
                if oy == 0 and ox == 0:
                    continue                                    # already in acc
                hxy = hy if ox == 0 else pltpu.roll(hy, shift=(-ox * cexp) % lanes, axis=1)
                acc = acc + hxy * wdw[dy * ksize + dx:dy * ksize + dx + 1, :]
        d = _silu_k(acc + bdw_ref[blk])                         # (H, lanes)

        # ---- squeeze-and-excitation (this sample), VPU/XLU only
        colsum = jnp.sum(d, axis=0, keepdims=True)              # (1, lanes): reduce over H
        if (w & (w - 1)) == 0:
            tot = colsum                                        # log2(W) butterfly over lane groups
            step = w // 2
            while step >= 1:
                tot = tot + pltpu.roll(tot, shift=lanes - step * cexp, axis=1)
                step //= 2
        else:
            tot = colsum
            for xx in range(1, w):
                tot = tot + pltpu.roll(colsum, shift=(lanes - xx * cexp) % lanes, axis=1)
        pooled = tot[:, :cexp] * (1.0 / (h * w))                # (1, cexp) global average pool

        wse1 = wse1t_ref[blk]                                   # (Csq, Cexp)
        bse1 = bse1_ref[blk]                                    # (1, Csq)
        wse2 = wse2t_ref[blk]                                   # (Csq, lanes)
        s2l = jnp.zeros((1, lanes), dtype=jnp.float32)
        for j in range(csq):                                    # csq==2: keep unrolled off the MXU
            sj = jnp.sum(pooled * wse1[j:j + 1, :], axis=1, keepdims=True)     # (1, 1)
            sj = _silu_k(sj + bse1[:, j:j + 1])
            s2l = s2l + sj * wse2[j:j + 1, :]
        gate = _sigmoid_k(s2l + bse2t_ref[blk])                 # (1, lanes) lane-tiled channel gate
        d = d * gate

        # ---- 1x1 project conv (+folded BN) + SiLU (ConvBNSiLU defaults => activation on)
        o = jnp.dot(d.astype(jnp.bfloat16), w3_ref[blk],
                    preferred_element_type=jnp.float32)
        o = _silu_k(o + b3_ref[blk])                            # (H, W*Cout), lane width = 128

        # ---- residual (StochDepth in eval mode == identity)
        if use_res[blk]:
            o = o + cur
        cur = o

    o_ref[...] = cur.astype(o_ref.dtype)


# ---------------------------------------------------------------------------
# One-time packing: fold BN, build block-diagonal / lane-tiled weights, stack per block.
# Hoisted out of the forward path (review item: don't redo kron/tile per call).
# ---------------------------------------------------------------------------
def pack_mbconv_chain(params_list, *, h, w, kernel_size):
    k = kernel_size
    pad = (k - 1) // 2
    p0 = params_list[0]
    cexp = p0["w1"].shape[1]
    cout = p0["w3"].shape[1]
    csq = p0["wse1"].shape[1]

    eye_w = jnp.eye(w, dtype=jnp.float32)
    xs = jnp.arange(w)
    keys = ["w1bd", "b1t", "wdwt", "bdwt", "wse1t", "bse1", "wse2t", "bse2t", "w3bd", "b3t"]
    stacks = {key: [] for key in keys}

    for p in params_list:
        # Fold BN affine into conv weights / biases (exact, f32).
        w1f = p["w1"] * p["bn1s"]
        b1f = p["b1"] * p["bn1s"] + p["bn1b"]
        wdwf = p["wdw"] * p["bn2s"]
        bdwf = p["bdw"] * p["bn2s"] + p["bn2b"]
        w3f = p["w3"] * p["bn3s"]
        b3f = p["b3"] * p["bn3s"] + p["bn3b"]

        # Block-diagonal 1x1 conv weights -> lane-dense matmuls; bf16 operands for the MXU.
        stacks["w1bd"].append(jnp.kron(eye_w, w1f).astype(jnp.bfloat16))   # (W*Cin,  W*Cexp)
        stacks["w3bd"].append(jnp.kron(eye_w, w3f).astype(jnp.bfloat16))   # (W*Cexp, W*Cout)
        stacks["b1t"].append(jnp.tile(b1f, (1, w)))
        stacks["b3t"].append(jnp.tile(b3f, (1, w)))

        # Depthwise tap weights, lane-tiled with the x-boundary mask folded in.
        rows_list = []
        for dy in range(k):
            for dx in range(k):
                ox = dx - pad
                validx = (((xs + ox) >= 0) & ((xs + ox) < w)).astype(jnp.float32)   # (W,)
                lane_mask = jnp.repeat(validx, cexp)                                # (W*Cexp,)
                rows_list.append(jnp.tile(wdwf[dy * k + dx], w) * lane_mask)
        stacks["wdwt"].append(jnp.stack(rows_list))                                 # (k*k, W*Cexp)
        stacks["bdwt"].append(jnp.tile(bdwf, (1, w)))

        # SE weights, pre-arranged so the kernel stays on VPU/XLU.
        stacks["wse1t"].append(p["wse1"].T)                     # (Csq, Cexp)
        stacks["bse1"].append(p["bse1"])                        # (1, Csq)
        stacks["wse2t"].append(jnp.tile(p["wse2"], (1, w)))     # (Csq, W*Cexp)
        stacks["bse2t"].append(jnp.tile(p["bse2"], (1, w)))     # (1, W*Cexp)

    packed = {key: jnp.stack(v) for key, v in stacks.items()}   # leading block axis

    # y-boundary masks for each tap row over this sample's H rows (shared by all blocks).
    ys = jnp.arange(h)
    rowm_cols = []
    for dy in range(k):
        oy = dy - pad
        rowm_cols.append((((ys + oy) >= 0) & ((ys + oy) < h)).astype(jnp.float32))
    packed["rowm"] = jnp.stack(rowm_cols, axis=1)               # (H, k)
    return packed, cexp, cout, csq


# ---------------------------------------------------------------------------
# Forward over the fused block chain.  Operates on lane-dense (N*H, W*C) activations;
# layout converters are only used once at the chain boundary.
# ---------------------------------------------------------------------------
def mbconv_chain_forward(x_lane, packed, *, n, h, w, cexp, cout, csq, kernel_size, use_res):
    cin = x_lane.shape[1] // w
    n_blocks = packed["w1bd"].shape[0]
    order = ["w1bd", "b1t", "wdwt", "bdwt", "rowm",
             "wse1t", "bse1", "wse2t", "bse2t", "w3bd", "b3t"]
    plist = [packed[key] for key in order]

    kernel = functools.partial(mbconv_chain_kernel, n_blocks=n_blocks, h=h, w=w,
                               cexp=cexp, csq=csq, ksize=kernel_size,
                               use_res=tuple(use_res))

    def full_spec(a):   # whole (small) weight array resident every grid step
        return pl.BlockSpec(a.shape, lambda i, nd=a.ndim: (0,) * nd)

    in_specs = [pl.BlockSpec((h, w * cin), lambda i: (i, 0))] + [full_spec(a) for a in plist]
    out = pl.pallas_call(
        kernel,
        out_shape=jax.ShapeDtypeStruct((n * h, w * cout), x_lane.dtype),
        grid=(n,),                                              # one sample per grid step
        in_specs=in_specs,
        out_specs=pl.BlockSpec((h, w * cout), lambda i: (i, 0)),
        compiler_params=pltpu.CompilerParams(
            dimension_semantics=("parallel",),                  # megacore shard on v7x
            vmem_limit_bytes=32 * 1024 * 1024),
    )(x_lane, *plist)
    return out


def nchw_to_lane(x_nchw):
    n, c, h, w = x_nchw.shape
    return jnp.transpose(x_nchw, (0, 2, 3, 1)).reshape(n * h, w * c)


def lane_to_nchw(y_lane, n, h, w, c):
    return jnp.transpose(y_lane.reshape(n, h, w, c), (0, 3, 1, 2))


# ---------------------------------------------------------------------------
# Synthetic parameters (BN folded to inference-mode affine) and pure-JAX reference.
# ---------------------------------------------------------------------------
def init_params(key, cin, cout, expand_ratio, k):
    cexp = cin * expand_ratio
    csq = max(1, cin // 4)
    eps = 1e-5
    keys = iter(jax.random.split(key, 32))

    def nrm(shape, scale=0.1):
        return (scale * jax.random.normal(next(keys), shape)).astype(jnp.float32)

    def bn(c):
        gamma = nrm((1, c), 0.5) + 1.0
        beta = nrm((1, c), 0.1)
        mean = nrm((1, c), 0.1)
        var = jax.random.uniform(next(keys), (1, c), minval=0.5,
                                 maxval=1.5).astype(jnp.float32)
        scale = gamma / jnp.sqrt(var + eps)
        shift = beta - mean * scale
        return scale, shift

    p = {}
    p["w1"] = nrm((cin, cexp))
    p["b1"] = nrm((1, cexp))
    p["bn1s"], p["bn1b"] = bn(cexp)
    p["wdw"] = nrm((k * k, cexp))        # depthwise weights, tap-major
    p["bdw"] = nrm((1, cexp))
    p["bn2s"], p["bn2b"] = bn(cexp)
    p["wse1"] = nrm((cexp, csq))
    p["bse1"] = nrm((1, csq))
    p["wse2"] = nrm((csq, cexp))
    p["bse2"] = nrm((1, cexp))
    p["w3"] = nrm((cexp, cout))
    p["b3"] = nrm((1, cout))
    p["bn3s"], p["bn3b"] = bn(cout)
    return p


def _silu_ref(v):
    return v * jax.nn.sigmoid(v)


def mbconv_reference(x_nchw, params, *, kernel_size, use_res):
    """Pure-JAX mirror of one block (BN folded, bf16 MXU operands, f32 elsewhere)."""
    p = params
    x = jnp.transpose(x_nchw, (0, 2, 3, 1)).astype(jnp.float32)
    N, H, W, Cin = x.shape
    w1f = p["w1"] * p["bn1s"]
    b1f = p["b1"] * p["bn1s"] + p["bn1b"]
    wdwf = p["wdw"] * p["bn2s"]
    bdwf = p["bdw"] * p["bn2s"] + p["bn2b"]
    w3f = p["w3"] * p["bn3s"]
    b3f = p["b3"] * p["bn3s"] + p["bn3b"]

    h = jnp.einsum('nhwc,cd->nhwd', x.astype(jnp.bfloat16), w1f.astype(jnp.bfloat16),
                   preferred_element_type=jnp.float32) + b1f[0]
    h = _silu_ref(h)
    pad = (kernel_size - 1) // 2
    hp = jnp.pad(h, ((0, 0), (pad, pad), (pad, pad), (0, 0)))
    acc = jnp.zeros_like(h)
    for dy in range(kernel_size):
        for dx in range(kernel_size):
            acc = acc + hp[:, dy:dy + H, dx:dx + W, :] * wdwf[dy * kernel_size + dx]
    d = _silu_ref(acc + bdwf[0])
    pooled = jnp.mean(d, axis=(1, 2))
    s = _silu_ref(pooled @ p["wse1"] + p["bse1"][0])
    s = jax.nn.sigmoid(s @ p["wse2"] + p["bse2"][0])
    d = d * s[:, None, None, :]
    o = jnp.einsum('nhwc,cd->nhwd', d.astype(jnp.bfloat16), w3f.astype(jnp.bfloat16),
                   preferred_element_type=jnp.float32) + b3f[0]
    o = _silu_ref(o)
    if use_res:
        o = o + x
    return jnp.transpose(o, (0, 3, 1, 2))


if __name__ == "__main__":
    # MBconfig: input_channels=8, out_channels=8, expand_ratio=2, kernel=3, stride=1,
    # sd_prob=0.2  -> expanded=16, squeeze=2, use_res=True.  Two consecutive blocks are
    # fused into one pallas_call to amortize launch overhead (review item).
    N, Cin, H, W = 2, 8, 16, 16
    Cout, expand_ratio, kernel_size, stride = 8, 2, 3, 1
    n_blocks = 2
    use_res = tuple((stride == 1 and Cin == Cout) for _ in range(n_blocks))

    key = jax.random.PRNGKey(0)
    kx, kp = jax.random.split(key)
    x = jax.random.normal(kx, (N, Cin, H, W), dtype=jnp.float32)
    pkeys = jax.random.split(kp, n_blocks)
    params_list = [init_params(k, Cin, Cout, expand_ratio, kernel_size) for k in pkeys]

    # One-time weight packing (hoisted out of the per-forward path).
    packed, cexp, cout, csq = pack_mbconv_chain(params_list, h=H, w=W,
                                                kernel_size=kernel_size)

    # Layout conversion once at the chain boundary; activations stay lane-dense in between.
    x_lane = nchw_to_lane(x)
    out_lane = mbconv_chain_forward(x_lane, packed, n=N, h=H, w=W, cexp=cexp,
                                    cout=cout, csq=csq, kernel_size=kernel_size,
                                    use_res=use_res)
    out_lane = jax.block_until_ready(out_lane)
    out = lane_to_nchw(out_lane, N, H, W, cout)

    ref = x
    for blk in range(n_blocks):
        ref = mbconv_reference(ref, params_list[blk], kernel_size=kernel_size,
                               use_res=use_res[blk])

    assert out.shape == (N, Cout, H, W), out.shape
    # Tolerance covers bf16 MXU operands + EUP approx-reciprocal sigmoid over 2 fused blocks.
    if not jnp.allclose(out, ref, atol=1e-2, rtol=1e-2):
        raise SystemExit("mismatch: max abs diff = %g"
                         % float(jnp.max(jnp.abs(out - ref))))
    print("KERNEL_OK")
</pallas_src>

<mosaic_0001>
module attributes {stable_mosaic.version = 11 : i64} {
  func.func @mbconv_chain_kernel(%arg0: i32, %arg1: memref<16x128xf32, #tpu.memory_space<vmem>>, %arg2: memref<2x128x256xbf16, #tpu.memory_space<vmem>>, %arg3: memref<2x1x256xf32, #tpu.memory_space<vmem>>, %arg4: memref<2x9x256xf32, #tpu.memory_space<vmem>>, %arg5: memref<2x1x256xf32, #tpu.memory_space<vmem>>, %arg6: memref<16x3xf32, #tpu.memory_space<vmem>>, %arg7: memref<2x2x16xf32, #tpu.memory_space<vmem>>, %arg8: memref<2x1x2xf32, #tpu.memory_space<vmem>>, %arg9: memref<2x2x256xf32, #tpu.memory_space<vmem>>, %arg10: memref<2x1x256xf32, #tpu.memory_space<vmem>>, %arg11: memref<2x256x128xbf16, #tpu.memory_space<vmem>>, %arg12: memref<2x1x128xf32, #tpu.memory_space<vmem>>, %arg13: memref<16x128xf32, #tpu.memory_space<vmem>>) attributes {dimension_semantics = [#tpu.dimension_semantics<parallel>], iteration_bounds = array<i64: 2>, scalar_prefetch = 0 : i64, scratch_operands = 0 : i64, tpu.core_type = #tpu.core_type<tc>, window_params = [{transform_indices = @transform_0, window_bounds = array<i64: 16, 128>}, {pipeline_mode = #tpu.pipeline_mode<synchronous>, transform_indices = @transform_1, window_bounds = array<i64: 2, 128, 256>}, {pipeline_mode = #tpu.pipeline_mode<synchronous>, transform_indices = @transform_2, window_bounds = array<i64: 2, 1, 256>}, {pipeline_mode = #tpu.pipeline_mode<synchronous>, transform_indices = @transform_3, window_bounds = array<i64: 2, 9, 256>}, {pipeline_mode = #tpu.pipeline_mode<synchronous>, transform_indices = @transform_4, window_bounds = array<i64: 2, 1, 256>}, {pipeline_mode = #tpu.pipeline_mode<synchronous>, transform_indices = @transform_5, window_bounds = array<i64: 16, 3>}, {pipeline_mode = #tpu.pipeline_mode<synchronous>, transform_indices = @transform_6, window_bounds = array<i64: 2, 2, 16>}, {pipeline_mode = #tpu.pipeline_mode<synchronous>, transform_indices = @transform_7, window_bounds = array<i64: 2, 1, 2>}, {pipeline_mode = #tpu.pipeline_mode<synchronous>, transform_indices = @transform_8, window_bounds = array<i64: 2, 2, 256>}, {pipeline_mode = #tpu.pipeline_mode<synchronous>, transform_indices = @transform_9, window_bounds = array<i64: 2, 1, 256>}, {pipeline_mode = #tpu.pipeline_mode<synchronous>, transform_indices = @transform_10, window_bounds = array<i64: 2, 256, 128>}, {pipeline_mode = #tpu.pipeline_mode<synchronous>, transform_indices = @transform_11, window_bounds = array<i64: 2, 1, 128>}, {transform_indices = @transform_12, window_bounds = array<i64: 16, 128>}]} {
    %c0 = arith.constant 0 : index
    %c0_0 = arith.constant 0 : index
    %0 = vector.load %arg6[%c0, %c0_0] : memref<16x3xf32, #tpu.memory_space<vmem>>, vector<16x3xf32>
    %c0_1 = arith.constant 0 : index
    %c0_2 = arith.constant 0 : index
    %1 = vector.load %arg1[%c0_1, %c0_2] : memref<16x128xf32, #tpu.memory_space<vmem>>, vector<16x128xf32>
    %2 = arith.truncf %1 : vector<16x128xf32> to vector<16x128xbf16>
    %c0_3 = arith.constant 0 : index
    %c0_4 = arith.constant 0 : index
    %c0_5 = arith.constant 0 : index
    %3 = vector.load %arg2[%c0_3, %c0_4, %c0_5] : memref<2x128x256xbf16, #tpu.memory_space<vmem>>, vector<1x128x256xbf16>
    %4 = vector.shape_cast %3 : vector<1x128x256xbf16> to vector<128x256xbf16>
    %cst = arith.constant dense<0.000000e+00> : vector<16x256xf32>
    %5 = tpu.matmul %2, %4, %cst {dimension_numbers = #tpu.dot_dimension_numbers<[1], [0], [0], [1], [0, 0, 1, 1], [], []>} : vector<16x128xbf16>, vector<128x256xbf16>, vector<16x256xf32> -> vector<16x256xf32>
    %c0_6 = arith.constant 0 : index
    %c0_7 = arith.constant 0 : index
    %c0_8 = arith.constant 0 : index
    %6 = vector.load %arg3[%c0_6, %c0_7, %c0_8] : memref<2x1x256xf32, #tpu.memory_space<vmem>>, vector<1x1x256xf32>
    %7 = vector.shape_cast %6 : vector<1x1x256xf32> to vector<1x256xf32>
    %8 = vector.broadcast %7 : vector<1x256xf32> to vector<16x256xf32>
    %9 = arith.addf %5, %8 : vector<16x256xf32>
    %cst_9 = arith.constant 0.000000e+00 : f32
    %10 = vector.broadcast %cst_9 : f32 to vector<16x256xf32>
    %11 = arith.subf %10, %9 : vector<16x256xf32>
    %12 = math.exp %11 : vector<16x256xf32>
    %cst_10 = arith.constant 1.000000e+00 : f32
    %13 = vector.broadcast %cst_10 : f32 to vector<16x256xf32>
    %14 = arith.addf %13, %12 : vector<16x256xf32>
    %15 = tpu.reciprocal %14 {approx = true} : vector<16x256xf32> -> vector<16x256xf32>
    %16 = arith.mulf %9, %15 : vector<16x256xf32>
    %c0_11 = arith.constant 0 : index
    %c0_12 = arith.constant 0 : index
    %c0_13 = arith.constant 0 : index
    %17 = vector.load %arg4[%c0_11, %c0_12, %c0_13] : memref<2x9x256xf32, #tpu.memory_space<vmem>>, vector<1x9x256xf32>
    %18 = vector.shape_cast %17 : vector<1x9x256xf32> to vector<9x256xf32>
    %19 = vector.extract_strided_slice %18 {offsets = [4, 0], sizes = [1, 256], strides = [1, 1]} : vector<9x256xf32> to vector<1x256xf32>
    %20 = vector.broadcast %19 : vector<1x256xf32> to vector<16x256xf32>
    %21 = arith.mulf %16, %20 : vector<16x256xf32>
    %c1_i32 = arith.constant 1 : i32
    %22 = tpu.dynamic_rotate %16 by %c1_i32 dim 0 : vector<16x256xf32>, i32 -> vector<16x256xf32>
    %23 = vector.extract_strided_slice %0 {offsets = [0, 0], sizes = [16, 1], strides = [1, 1]} : vector<16x3xf32> to vector<16x1xf32>
    %24 = vector.broadcast %23 : vector<16x1xf32> to vector<16x256xf32>
    %25 = arith.mulf %22, %24 : vector<16x256xf32>
    %c16_i32 = arith.constant 16 : i32
    %26 = tpu.dynamic_rotate %25 by %c16_i32 dim 1 : vector<16x256xf32>, i32 -> vector<16x256xf32>
    %27 = vector.extract_strided_slice %18 {offsets = [0, 0], sizes = [1, 256], strides = [1, 1]} : vector<9x256xf32> to vector<1x256xf32>
    %28 = vector.broadcast %27 : vector<1x256xf32> to vector<16x256xf32>
    %29 = arith.mulf %26, %28 : vector<16x256xf32>
    %30 = arith.addf %21, %29 : vector<16x256xf32>
    %31 = vector.extract_strided_slice %18 {offsets = [1, 0], sizes = [1, 256], strides = [1, 1]} : vector<9x256xf32> to vector<1x256xf32>
    %32 = vector.broadcast %31 : vector<1x256xf32> to vector<16x256xf32>
    %33 = arith.mulf %25, %32 : vector<16x256xf32>
    %34 = arith.addf %30, %33 : vector<16x256xf32>
    %c240_i32 = arith.constant 240 : i32
    %35 = tpu.dynamic_rotate %25 by %c240_i32 dim 1 : vector<16x256xf32>, i32 -> vector<16x256xf32>
    %36 = vector.extract_strided_slice %18 {offsets = [2, 0], sizes = [1, 256], strides = [1, 1]} : vector<9x256xf32> to vector<1x256xf32>
    %37 = vector.broadcast %36 : vector<1x256xf32> to vector<16x256xf32>
    %38 = arith.mulf %35, %37 : vector<16x256xf32>
    %39 = arith.addf %34, %38 : vector<16x256xf32>
    %c16_i32_14 = arith.constant 16 : i32
    %40 = tpu.dynamic_rotate %16 by %c16_i32_14 dim 1 : vector<16x256xf32>, i32 -> vector<16x256xf32>
    %41 = vector.extract_strided_slice %18 {offsets = [3, 0], sizes = [1, 256], strides = [1, 1]} : vector<9x256xf32> to vector<1x256xf32>
    %42 = vector.broadcast %41 : vector<1x256xf32> to vector<16x256xf32>
    %43 = arith.mulf %40, %42 : vector<16x256xf32>
    %44 = arith.addf %39, %43 : vector<16x256xf32>
    %c240_i32_15 = arith.constant 240 : i32
    %45 = tpu.dynamic_rotate %16 by %c240_i32_15 dim 1 : vector<16x256xf32>, i32 -> vector<16x256xf32>
    %46 = vector.extract_strided_slice %18 {offsets = [5, 0], sizes = [1, 256], strides = [1, 1]} : vector<9x256xf32> to vector<1x256xf32>
    %47 = vector.broadcast %46 : vector<1x256xf32> to vector<16x256xf32>
    %48 = arith.mulf %45, %47 : vector<16x256xf32>
    %49 = arith.addf %44, %48 : vector<16x256xf32>
    %c15_i32 = arith.constant 15 : i32
    %50 = tpu.dynamic_rotate %16 by %c15_i32 dim 0 : vector<16x256xf32>, i32 -> vector<16x256xf32>
    %51 = vector.extract_strided_slice %0 {offsets = [0, 2], sizes = [16, 1], strides = [1, 1]} : vector<16x3xf32> to vector<16x1xf32>
    %52 = vector.broadcast %51 : vector<16x1xf32> to vector<16x256xf32>
    %53 = arith.mulf %50, %52 : vector<16x256xf32>
    %c16_i32_16 = arith.constant 16 : i32
    %54 = tpu.dynamic_rotate %53 by %c16_i32_16 dim 1 : vector<16x256xf32>, i32 -> vector<16x256xf32>
    %55 = vector.extract_strided_slice %18 {offsets = [6, 0], sizes = [1, 256], strides = [1, 1]} : vector<9x256xf32> to vector<1x256xf32>
    %56 = vector.broadcast %55 : vector<1x256xf32> to vector<16x256xf32>
    %57 = arith.mulf %54, %56 : vector<16x256xf32>
    %58 = arith.addf %49, %57 : vector<16x256xf32>
    %59 = vector.extract_strided_slice %18 {offsets = [7, 0], sizes = [1, 256], strides = [1, 1]} : vector<9x256xf32> to vector<1x256xf32>
    %60 = vector.broadcast %59 : vector<1x256xf32> to vector<16x256xf32>
    %61 = arith.mulf %53, %60 : vector<16x256xf32>
    %62 = arith.addf %58, %61 : vector<16x256xf32>
    %c240_i32_17 = arith.constant 240 : i32
    %63 = tpu.dynamic_rotate %53 by %c240_i32_17 dim 1 : vector<16x256xf32>, i32 -> vector<16x256xf32>
    %64 = vector.extract_strided_slice %18 {offsets = [8, 0], sizes = [1, 256], strides = [1, 1]} : vector<9x256xf32> to vector<1x256xf32>
    %65 = vector.broadcast %64 : vector<1x256xf32> to vector<16x256xf32>
    %66 = arith.mulf %63, %65 : vector<16x256xf32>
    %67 = arith.addf %62, %66 : vector<16x256xf32>
    %c0_18 = arith.constant 0 : index
    %c0_19 = arith.constant 0 : index
    %c0_20 = arith.constant 0 : index
    %68 = vector.load %arg5[%c0_18, %c0_19, %c0_20] : memref<2x1x256xf32, #tpu.memory_space<vmem>>, vector<1x1x256xf32>
    %69 = vector.shape_cast %68 : vector<1x1x256xf32> to vector<1x256xf32>
    %70 = vector.broadcast %69 : vector<1x256xf32> to vector<16x256xf32>
    %71 = arith.addf %67, %70 : vector<16x256xf32>
    %cst_21 = arith.constant 0.000000e+00 : f32
    %72 = vector.broadcast %cst_21 : f32 to vector<16x256xf32>
    %73 = arith.subf %72, %71 : vector<16x256xf32>
    %74 = math.exp %73 : vector<16x256xf32>
    %cst_22 = arith.constant 1.000000e+00 : f32
    %75 = vector.broadcast %cst_22 : f32 to vector<16x256xf32>
    %76 = arith.addf %75, %74 : vector<16x256xf32>
    %77 = tpu.reciprocal %76 {approx = true} : vector<16x256xf32> -> vector<16x256xf32>
    %78 = arith.mulf %71, %77 : vector<16x256xf32>
    %cst_23 = arith.constant dense<0.000000e+00> : vector<256xf32>
    %79 = vector.multi_reduction <add>, %78, %cst_23 [0] : vector<16x256xf32> to vector<256xf32>
    %80 = vector.shape_cast %79 : vector<256xf32> to vector<1x256xf32>
    %c128_i32 = arith.constant 128 : i32
    %81 = tpu.dynamic_rotate %80 by %c128_i32 dim 1 : vector<1x256xf32>, i32 -> vector<1x256xf32>
    %82 = arith.addf %80, %81 : vector<1x256xf32>
    %c192_i32 = arith.constant 192 : i32
    %83 = tpu.dynamic_rotate %82 by %c192_i32 dim 1 : vector<1x256xf32>, i32 -> vector<1x256xf32>
    %84 = arith.addf %82, %83 : vector<1x256xf32>
    %c224_i32 = arith.constant 224 : i32
    %85 = tpu.dynamic_rotate %84 by %c224_i32 dim 1 : vector<1x256xf32>, i32 -> vector<1x256xf32>
    %86 = arith.addf %84, %85 : vector<1x256xf32>
    %c240_i32_24 = arith.constant 240 : i32
    %87 = tpu.dynamic_rotate %86 by %c240_i32_24 dim 1 : vector<1x256xf32>, i32 -> vector<1x256xf32>
    %88 = arith.addf %86, %87 : vector<1x256xf32>
    %89 = vector.extract_strided_slice %88 {offsets = [0, 0], sizes = [1, 16], strides = [1, 1]} : vector<1x256xf32> to vector<1x16xf32>
    %cst_25 = arith.constant 3.906250e-03 : f32
    %90 = vector.broadcast %cst_25 : f32 to vector<1x16xf32>
    %91 = arith.mulf %89, %90 : vector<1x16xf32>
    %c0_26 = arith.constant 0 : index
    %c0_27 = arith.constant 0 : index
    %c0_28 = arith.constant 0 : index
    %92 = vector.load %arg7[%c0_26, %c0_27, %c0_28] : memref<2x2x16xf32, #tpu.memory_space<vmem>>, vector<1x2x16xf32>
    %93 = vector.shape_cast %92 : vector<1x2x16xf32> to vector<2x16xf32>
    %c0_29 = arith.constant 0 : index
    %c0_30 = arith.constant 0 : index
    %c0_31 = arith.constant 0 : index
    %94 = vector.load %arg8[%c0_29, %c0_30, %c0_31] : memref<2x1x2xf32, #tpu.memory_space<vmem>>, vector<1x1x2xf32>
    %95 = vector.shape_cast %94 : vector<1x1x2xf32> to vector<1x2xf32>
    %c0_32 = arith.constant 0 : index
    %c0_33 = arith.constant 0 : index
    %c0_34 = arith.constant 0 : index
    %96 = vector.load %arg9[%c0_32, %c0_33, %c0_34] : memref<2x2x256xf32, #tpu.memory_space<vmem>>, vector<1x2x256xf32>
    %97 = vector.shape_cast %96 : vector<1x2x256xf32> to vector<2x256xf32>
    %cst_35 = arith.constant 0.000000e+00 : f32
    %98 = vector.broadcast %cst_35 : f32 to vector<1x256xf32>
    %99 = vector.extract_strided_slice %93 {offsets = [0, 0], sizes = [1, 16], strides = [1, 1]} : vector<2x16xf32> to vector<1x16xf32>
    %100 = arith.mulf %91, %99 : vector<1x16xf32>
    %cst_36 = arith.constant dense<0.000000e+00> : vector<1xf32>
    %101 = vector.multi_reduction <add>, %100, %cst_36 [1] : vector<1x16xf32> to vector<1xf32>
    %102 = vector.shape_cast %101 : vector<1xf32> to vector<1x1xf32>
    %103 = vector.extract_strided_slice %95 {offsets = [0, 0], sizes = [1, 1], strides = [1, 1]} : vector<1x2xf32> to vector<1x1xf32>
    %104 = arith.addf %102, %103 : vector<1x1xf32>
    %cst_37 = arith.constant 0.000000e+00 : f32
    %105 = vector.broadcast %cst_37 : f32 to vector<1x1xf32>
    %106 = arith.subf %105, %104 : vector<1x1xf32>
    %107 = math.exp %106 : vector<1x1xf32>
    %cst_38 = arith.constant 1.000000e+00 : f32
    %108 = vector.broadcast %cst_38 : f32 to vector<1x1xf32>
    %109 = arith.addf %108, %107 : vector<1x1xf32>
    %110 = tpu.reciprocal %109 {approx = true} : vector<1x1xf32> -> vector<1x1xf32>
    %111 = arith.mulf %104, %110 : vector<1x1xf32>
    %112 = vector.extract_strided_slice %97 {offsets = [0, 0], sizes = [1, 256], strides = [1, 1]} : vector<2x256xf32> to vector<1x256xf32>
    %113 = vector.broadcast %111 : vector<1x1xf32> to vector<1x256xf32>
    %114 = arith.mulf %113, %112 : vector<1x256xf32>
    %115 = arith.addf %98, %114 : vector<1x256xf32>
    %116 = vector.extract_strided_slice %93 {offsets = [1, 0], sizes = [1, 16], strides = [1, 1]} : vector<2x16xf32> to vector<1x16xf32>
    %117 = arith.mulf %91, %116 : vector<1x16xf32>
    %cst_39 = arith.constant dense<0.000000e+00> : vector<1xf32>
    %118 = vector.multi_reduction <add>, %117, %cst_39 [1] : vector<1x16xf32> to vector<1xf32>
    %119 = vector.shape_cast %118 : vector<1xf32> to vector<1x1xf32>
    %120 = vector.extract_strided_slice %95 {offsets = [0, 1], sizes = [1, 1], strides = [1, 1]} : vector<1x2xf32> to vector<1x1xf32>
    %121 = arith.addf %119, %120 : vector<1x1xf32>
    %cst_40 = arith.constant 0.000000e+00 : f32
    %122 = vector.broadcast %cst_40 : f32 to vector<1x1xf32>
    %123 = arith.subf %122, %121 : vector<1x1xf32>
    %124 = math.exp %123 : vector<1x1xf32>
    %cst_41 = arith.constant 1.000000e+00 : f32
    %125 = vector.broadcast %cst_41 : f32 to vector<1x1xf32>
    %126 = arith.addf %125, %124 : vector<1x1xf32>
    %127 = tpu.reciprocal %126 {approx = true} : vector<1x1xf32> -> vector<1x1xf32>
    %128 = arith.mulf %121, %127 : vector<1x1xf32>
    %129 = vector.extract_strided_slice %97 {offsets = [1, 0], sizes = [1, 256], strides = [1, 1]} : vector<2x256xf32> to vector<1x256xf32>
    %130 = vector.broadcast %128 : vector<1x1xf32> to vector<1x256xf32>
    %131 = arith.mulf %130, %129 : vector<1x256xf32>
    %132 = arith.addf %115, %131 : vector<1x256xf32>
    %c0_42 = arith.constant 0 : index
    %c0_43 = arith.constant 0 : index
    %c0_44 = arith.constant 0 : index
    %133 = vector.load %arg10[%c0_42, %c0_43, %c0_44] : memref<2x1x256xf32, #tpu.memory_space<vmem>>, vector<1x1x256xf32>
    %134 = vector.shape_cast %133 : vector<1x1x256xf32> to vector<1x256xf32>
    %135 = arith.addf %132, %134 : vector<1x256xf32>
    %cst_45 = arith.constant 0.000000e+00 : f32
    %136 = vector.broadcast %cst_45 : f32 to vector<1x256xf32>
    %137 = arith.subf %136, %135 : vector<1x256xf32>
    %138 = math.exp %137 : vector<1x256xf32>
    %cst_46 = arith.constant 1.000000e+00 : f32
    %139 = vector.broadcast %cst_46 : f32 to vector<1x256xf32>
    %140 = arith.addf %139, %138 : vector<1x256xf32>
    %141 = tpu.reciprocal %140 {approx = true} : vector<1x256xf32> -> vector<1x256xf32>
    %142 = vector.broadcast %141 : vector<1x256xf32> to vector<16x256xf32>
    %143 = arith.mulf %78, %142 : vector<16x256xf32>
    %144 = arith.truncf %143 : vector<16x256xf32> to vector<16x256xbf16>
    %c0_47 = arith.constant 0 : index
    %c0_48 = arith.constant 0 : index
    %c0_49 = arith.constant 0 : index
    %145 = vector.load %arg11[%c0_47, %c0_48, %c0_49] : memref<2x256x128xbf16, #tpu.memory_space<vmem>>, vector<1x256x128xbf16>
    %146 = vector.shape_cast %145 : vector<1x256x128xbf16> to vector<256x128xbf16>
    %cst_50 = arith.constant dense<0.000000e+00> : vector<16x128xf32>
    %147 = tpu.matmul %144, %146, %cst_50 {dimension_numbers = #tpu.dot_dimension_numbers<[1], [0], [0], [1], [0, 0, 1, 1], [], []>} : vector<16x256xbf16>, vector<256x128xbf16>, vector<16x128xf32> -> vector<16x128xf32>
    %c0_51 = arith.constant 0 : index
    %c0_52 = arith.constant 0 : index
    %c0_53 = arith.constant 0 : index
    %148 = vector.load %arg12[%c0_51, %c0_52, %c0_53] : memref<2x1x128xf32, #tpu.memory_space<vmem>>, vector<1x1x128xf32>
    %149 = vector.shape_cast %148 : vector<1x1x128xf32> to vector<1x128xf32>
    %150 = vector.broadcast %149 : vector<1x128xf32> to vector<16x128xf32>
    %151 = arith.addf %147, %150 : vector<16x128xf32>
    %cst_54 = arith.constant 0.000000e+00 : f32
    %152 = vector.broadcast %cst_54 : f32 to vector<16x128xf32>
    %153 = arith.subf %152, %151 : vector<16x128xf32>
    %154 = math.exp %153 : vector<16x128xf32>
    %cst_55 = arith.constant 1.000000e+00 : f32
    %155 = vector.broadcast %cst_55 : f32 to vector<16x128xf32>
    %156 = arith.addf %155, %154 : vector<16x128xf32>
    %157 = tpu.reciprocal %156 {approx = true} : vector<16x128xf32> -> vector<16x128xf32>
    %158 = arith.mulf %151, %157 : vector<16x128xf32>
    %159 = arith.addf %158, %1 : vector<16x128xf32>
    %160 = arith.truncf %159 : vector<16x128xf32> to vector<16x128xbf16>
    %c1 = arith.constant 1 : index
    %c0_56 = arith.constant 0 : index
    %c0_57 = arith.constant 0 : index
    %161 = vector.load %arg2[%c1, %c0_56, %c0_57] : memref<2x128x256xbf16, #tpu.memory_space<vmem>>, vector<1x128x256xbf16>
    %162 = vector.shape_cast %161 : vector<1x128x256xbf16> to vector<128x256xbf16>
    %cst_58 = arith.constant dense<0.000000e+00> : vector<16x256xf32>
    %163 = tpu.matmul %160, %162, %cst_58 {dimension_numbers = #tpu.dot_dimension_numbers<[1], [0], [0], [1], [0, 0, 1, 1], [], []>} : vector<16x128xbf16>, vector<128x256xbf16>, vector<16x256xf32> -> vector<16x256xf32>
    %c1_59 = arith.constant 1 : index
    %c0_60 = arith.constant 0 : index
    %c0_61 = arith.constant 0 : index
    %164 = vector.load %arg3[%c1_59, %c0_60, %c0_61] : memref<2x1x256xf32, #tpu.memory_space<vmem>>, vector<1x1x256xf32>
    %165 = vector.shape_cast %164 : vector<1x1x256xf32> to vector<1x256xf32>
    %166 = vector.broadcast %165 : vector<1x256xf32> to vector<16x256xf32>
    %167 = arith.addf %163, %166 : vector<16x256xf32>
    %cst_62 = arith.constant 0.000000e+00 : f32
    %168 = vector.broadcast %cst_62 : f32 to vector<16x256xf32>
    %169 = arith.subf %168, %167 : vector<16x256xf32>
    %170 = math.exp %169 : vector<16x256xf32>
    %cst_63 = arith.constant 1.000000e+00 : f32
    %171 = vector.broadcast %cst_63 : f32 to vector<16x256xf32>
    %172 = arith.addf %171, %170 : vector<16x256xf32>
    %173 = tpu.reciprocal %172 {approx = true} : vector<16x256xf32> -> vector<16x256xf32>
    %174 = arith.mulf %167, %173 : vector<16x256xf32>
    %c1_64 = arith.constant 1 : index
    %c0_65 = arith.constant 0 : index
    %c0_66 = arith.constant 0 : index
    %175 = vector.load %arg4[%c1_64, %c0_65, %c0_66] : memref<2x9x256xf32, #tpu.memory_space<vmem>>, vector<1x9x256xf32>
    %176 = vector.shape_cast %175 : vector<1x9x256xf32> to vector<9x256xf32>
    %177 = vector.extract_strided_slice %176 {offsets = [4, 0], sizes = [1, 256], strides = [1, 1]} : vector<9x256xf32> to vector<1x256xf32>
    %178 = vector.broadcast %177 : vector<1x256xf32> to vector<16x256xf32>
    %179 = arith.mulf %174, %178 : vector<16x256xf32>
    %c1_i32_67 = arith.constant 1 : i32
    %180 = tpu.dynamic_rotate %174 by %c1_i32_67 dim 0 : vector<16x256xf32>, i32 -> vector<16x256xf32>
    %181 = vector.extract_strided_slice %0 {offsets = [0, 0], sizes = [16, 1], strides = [1, 1]} : vector<16x3xf32> to vector<16x1xf32>
    %182 = vector.broadcast %181 : vector<16x1xf32> to vector<16x256xf32>
    %183 = arith.mulf %180, %182 : vector<16x256xf32>
    %c16_i32_68 = arith.constant 16 : i32
    %184 = tpu.dynamic_rotate %183 by %c16_i32_68 dim 1 : vector<16x256xf32>, i32 -> vector<16x256xf32>
    %185 = vector.extract_strided_slice %176 {offsets = [0, 0], sizes = [1, 256], strides = [1, 1]} : vector<9x256xf32> to vector<1x256xf32>
    %186 = vector.broadcast %185 : vector<1x256xf32> to vector<16x256xf32>
    %187 = arith.mulf %184, %186 : vector<16x256xf32>
    %188 = arith.addf %179, %187 : vector<16x256xf32>
    %189 = vector.extract_strided_slice %176 {offsets = [1, 0], sizes = [1, 256], strides = [1, 1]} : vector<9x256xf32> to vector<1x256xf32>
    %190 = vector.broadcast %189 : vector<1x256xf32> to vector<16x256xf32>
    %191 = arith.mulf %183, %190 : vector<16x256xf32>
    %192 = arith.addf %188, %191 : vector<16x256xf32>
    %c240_i32_69 = arith.constant 240 : i32
    %193 = tpu.dynamic_rotate %183 by %c240_i32_69 dim 1 : vector<16x256xf32>, i32 -> vector<16x256xf32>
    %194 = vector.extract_strided_slice %176 {offsets = [2, 0], sizes = [1, 256], strides = [1, 1]} : vector<9x256xf32> to vector<1x256xf32>
    %195 = vector.broadcast %194 : vector<1x256xf32> to vector<16x256xf32>
    %196 = arith.mulf %193, %195 : vector<16x256xf32>
    %197 = arith.addf %192, %196 : vector<16x256xf32>
    %c16_i32_70 = arith.constant 16 : i32
    %198 = tpu.dynamic_rotate %174 by %c16_i32_70 dim 1 : vector<16x256xf32>, i32 -> vector<16x256xf32>
    %199 = vector.extract_strided_slice %176 {offsets = [3, 0], sizes = [1, 256], strides = [1, 1]} : vector<9x256xf32> to vector<1x256xf32>
    %200 = vector.broadcast %199 : vector<1x256xf32> to vector<16x256xf32>
    %201 = arith.mulf %198, %200 : vector<16x256xf32>
    %202 = arith.addf %197, %201 : vector<16x256xf32>
    %c240_i32_71 = arith.constant 240 : i32
    %203 = tpu.dynamic_rotate %174 by %c240_i32_71 dim 1 : vector<16x256xf32>, i32 -> vector<16x256xf32>
    %204 = vector.extract_strided_slice %176 {offsets = [5, 0], sizes = [1, 256], strides = [1, 1]} : vector<9x256xf32> to vector<1x256xf32>
    %205 = vector.broadcast %204 : vector<1x256xf32> to vector<16x256xf32>
    %206 = arith.mulf %203, %205 : vector<16x256xf32>
    %207 = arith.addf %202, %206 : vector<16x256xf32>
    %c15_i32_72 = arith.constant 15 : i32
    %208 = tpu.dynamic_rotate %174 by %c15_i32_72 dim 0 : vector<16x256xf32>, i32 -> vector<16x256xf32>
    %209 = vector.extract_strided_slice %0 {offsets = [0, 2], sizes = [16, 1], strides = [1, 1]} : vector<16x3xf32> to vector<16x1xf32>
    %210 = vector.broadcast %209 : vector<16x1xf32> to vector<16x256xf32>
    %211 = arith.mulf %208, %210 : vector<16x256xf32>
    %c16_i32_73 = arith.constant 16 : i32
    %212 = tpu.dynamic_rotate %211 by %c16_i32_73 dim 1 : vector<16x256xf32>, i32 -> vector<16x256xf32>
    %213 = vector.extract_strided_slice %176 {offsets = [6, 0], sizes = [1, 256], strides = [1, 1]} : vector<9x256xf32> to vector<1x256xf32>
    %214 = vector.broadcast %213 : vector<1x256xf32> to vector<16x256xf32>
    %215 = arith.mulf %212, %214 : vector<16x256xf32>
    %216 = arith.addf %207, %215 : vector<16x256xf32>
    %217 = vector.extract_strided_slice %176 {offsets = [7, 0], sizes = [1, 256], strides = [1, 1]} : vector<9x256xf32> to vector<1x256xf32>
    %218 = vector.broadcast %217 : vector<1x256xf32> to vector<16x256xf32>
    %219 = arith.mulf %211, %218 : vector<16x256xf32>
    %220 = arith.addf %216, %219 : vector<16x256xf32>
    %c240_i32_74 = arith.constant 240 : i32
    %221 = tpu.dynamic_rotate %211 by %c240_i32_74 dim 1 : vector<16x256xf32>, i32 -> vector<16x256xf32>
    %222 = vector.extract_strided_slice %176 {offsets = [8, 0], sizes = [1, 256], strides = [1, 1]} : vector<9x256xf32> to vector<1x256xf32>
    %223 = vector.broadcast %222 : vector<1x256xf32> to vector<16x256xf32>
    %224 = arith.mulf %221, %223 : vector<16x256xf32>
    %225 = arith.addf %220, %224 : vector<16x256xf32>
    %c1_75 = arith.constant 1 : index
    %c0_76 = arith.constant 0 : index
    %c0_77 = arith.constant 0 : index
    %226 = vector.load %arg5[%c1_75, %c0_76, %c0_77] : memref<2x1x256xf32, #tpu.memory_space<vmem>>, vector<1x1x256xf32>
    %227 = vector.shape_cast %226 : vector<1x1x256xf32> to vector<1x256xf32>
    %228 = vector.broadcast %227 : vector<1x256xf32> to vector<16x256xf32>
    %229 = arith.addf %225, %228 : vector<16x256xf32>
    %cst_78 = arith.constant 0.000000e+00 : f32
    %230 = vector.broadcast %cst_78 : f32 to vector<16x256xf32>
    %231 = arith.subf %230, %229 : vector<16x256xf32>
    %232 = math.exp %231 : vector<16x256xf32>
    %cst_79 = arith.constant 1.000000e+00 : f32
    %233 = vector.broadcast %cst_79 : f32 to vector<16x256xf32>
    %234 = arith.addf %233, %232 : vector<16x256xf32>
    %235 = tpu.reciprocal %234 {approx = true} : vector<16x256xf32> -> vector<16x256xf32>
    %236 = arith.mulf %229, %235 : vector<16x256xf32>
    %cst_80 = arith.constant dense<0.000000e+00> : vector<256xf32>
    %237 = vector.multi_reduction <add>, %236, %cst_80 [0] : vector<16x256xf32> to vector<256xf32>
    %238 = vector.shape_cast %237 : vector<256xf32> to vector<1x256xf32>
    %c128_i32_81 = arith.constant 128 : i32
    %239 = tpu.dynamic_rotate %238 by %c128_i32_81 dim 1 : vector<1x256xf32>, i32 -> vector<1x256xf32>
    %240 = arith.addf %238, %239 : vector<1x256xf32>
    %c192_i32_82 = arith.constant 192 : i32
    %241 = tpu.dynamic_rotate %240 by %c192_i32_82 dim 1 : vector<1x256xf32>, i32 -> vector<1x256xf32>
    %242 = arith.addf %240, %241 : vector<1x256xf32>
    %c224_i32_83 = arith.constant 224 : i32
    %243 = tpu.dynamic_rotate %242 by %c224_i32_83 dim 1 : vector<1x256xf32>, i32 -> vector<1x256xf32>
    %244 = arith.addf %242, %243 : vector<1x256xf32>
    %c240_i32_84 = arith.constant 240 : i32
    %245 = tpu.dynamic_rotate %244 by %c240_i32_84 dim 1 : vector<1x256xf32>, i32 -> vector<1x256xf32>
    %246 = arith.addf %244, %245 : vector<1x256xf32>
    %247 = vector.extract_strided_slice %246 {offsets = [0, 0], sizes = [1, 16], strides = [1, 1]} : vector<1x256xf32> to vector<1x16xf32>
    %cst_85 = arith.constant 3.906250e-03 : f32
    %248 = vector.broadcast %cst_85 : f32 to vector<1x16xf32>
    %249 = arith.mulf %247, %248 : vector<1x16xf32>
    %c1_86 = arith.constant 1 : index
    %c0_87 = arith.constant 0 : index
    %c0_88 = arith.constant 0 : index
    %250 = vector.load %arg7[%c1_86, %c0_87, %c0_88] : memref<2x2x16xf32, #tpu.memory_space<vmem>>, vector<1x2x16xf32>
    %251 = vector.shape_cast %250 : vector<1x2x16xf32> to vector<2x16xf32>
    %c1_89 = arith.constant 1 : index
    %c0_90 = arith.constant 0 : index
    %c0_91 = arith.constant 0 : index
    %252 = vector.load %arg8[%c1_89, %c0_90, %c0_91] : memref<2x1x2xf32, #tpu.memory_space<vmem>>, vector<1x1x2xf32>
    %253 = vector.shape_cast %252 : vector<1x1x2xf32> to vector<1x2xf32>
    %c1_92 = arith.constant 1 : index
    %c0_93 = arith.constant 0 : index
    %c0_94 = arith.constant 0 : index
    %254 = vector.load %arg9[%c1_92, %c0_93, %c0_94] : memref<2x2x256xf32, #tpu.memory_space<vmem>>, vector<1x2x256xf32>
    %255 = vector.shape_cast %254 : vector<1x2x256xf32> to vector<2x256xf32>
    %cst_95 = arith.constant 0.000000e+00 : f32
    %256 = vector.broadcast %cst_95 : f32 to vector<1x256xf32>
    %257 = vector.extract_strided_slice %251 {offsets = [0, 0], sizes = [1, 16], strides = [1, 1]} : vector<2x16xf32> to vector<1x16xf32>
    %258 = arith.mulf %249, %257 : vector<1x16xf32>
    %cst_96 = arith.constant dense<0.000000e+00> : vector<1xf32>
    %259 = vector.multi_reduction <add>, %258, %cst_96 [1] : vector<1x16xf32> to vector<1xf32>
    %260 = vector.shape_cast %259 : vector<1xf32> to vector<1x1xf32>
    %261 = vector.extract_strided_slice %253 {offsets = [0, 0], sizes = [1, 1], strides = [1, 1]} : vector<1x2xf32> to vector<1x1xf32>
    %262 = arith.addf %260, %261 : vector<1x1xf32>
    %cst_97 = arith.constant 0.000000e+00 : f32
    %263 = vector.broadcast %cst_97 : f32 to vector<1x1xf32>
    %264 = arith.subf %263, %262 : vector<1x1xf32>
    %265 = math.exp %264 : vector<1x1xf32>
    %cst_98 = arith.constant 1.000000e+00 : f32
    %266 = vector.broadcast %cst_98 : f32 to vector<1x1xf32>
    %267 = arith.addf %266, %265 : vector<1x1xf32>
    %268 = tpu.reciprocal %267 {approx = true} : vector<1x1xf32> -> vector<1x1xf32>
    %269 = arith.mulf %262, %268 : vector<1x1xf32>
    %270 = vector.extract_strided_slice %255 {offsets = [0, 0], sizes = [1, 256], strides = [1, 1]} : vector<2x256xf32> to vector<1x256xf32>
    %271 = vector.broadcast %269 : vector<1x1xf32> to vector<1x256xf32>
    %272 = arith.mulf %271, %270 : vector<1x256xf32>
    %273 = arith.addf %256, %272 : vector<1x256xf32>
    %274 = vector.extract_strided_slice %251 {offsets = [1, 0], sizes = [1, 16], strides = [1, 1]} : vector<2x16xf32> to vector<1x16xf32>
    %275 = arith.mulf %249, %274 : vector<1x16xf32>
    %cst_99 = arith.constant dense<0.000000e+00> : vector<1xf32>
    %276 = vector.multi_reduction <add>, %275, %cst_99 [1] : vector<1x16xf32> to vector<1xf32>
    %277 = vector.shape_cast %276 : vector<1xf32> to vector<1x1xf32>
    %278 = vector.extract_strided_slice %253 {offsets = [0, 1], sizes = [1, 1], strides = [1, 1]} : vector<1x2xf32> to vector<1x1xf32>
    %279 = arith.addf %277, %278 : vector<1x1xf32>
    %cst_100 = arith.constant 0.000000e+00 : f32
    %280 = vector.broadcast %cst_100 : f32 to vector<1x1xf32>
    %281 = arith.subf %280, %279 : vector<1x1xf32>
    %282 = math.exp %281 : vector<1x1xf32>
    %cst_101 = arith.constant 1.000000e+00 : f32
    %283 = vector.broadcast %cst_101 : f32 to vector<1x1xf32>
    %284 = arith.addf %283, %282 : vector<1x1xf32>
    %285 = tpu.reciprocal %284 {approx = true} : vector<1x1xf32> -> vector<1x1xf32>
    %286 = arith.mulf %279, %285 : vector<1x1xf32>
    %287 = vector.extract_strided_slice %255 {offsets = [1, 0], sizes = [1, 256], strides = [1, 1]} : vector<2x256xf32> to vector<1x256xf32>
    %288 = vector.broadcast %286 : vector<1x1xf32> to vector<1x256xf32>
    %289 = arith.mulf %288, %287 : vector<1x256xf32>
    %290 = arith.addf %273, %289 : vector<1x256xf32>
    %c1_102 = arith.constant 1 : index
    %c0_103 = arith.constant 0 : index
    %c0_104 = arith.constant 0 : index
    %291 = vector.load %arg10[%c1_102, %c0_103, %c0_104] : memref<2x1x256xf32, #tpu.memory_space<vmem>>, vector<1x1x256xf32>
    %292 = vector.shape_cast %291 : vector<1x1x256xf32> to vector<1x256xf32>
    %293 = arith.addf %290, %292 : vector<1x256xf32>
    %cst_105 = arith.constant 0.000000e+00 : f32
    %294 = vector.broadcast %cst_105 : f32 to vector<1x256xf32>
    %295 = arith.subf %294, %293 : vector<1x256xf32>
    %296 = math.exp %295 : vector<1x256xf32>
    %cst_106 = arith.constant 1.000000e+00 : f32
    %297 = vector.broadcast %cst_106 : f32 to vector<1x256xf32>
    %298 = arith.addf %297, %296 : vector<1x256xf32>
    %299 = tpu.reciprocal %298 {approx = true} : vector<1x256xf32> -> vector<1x256xf32>
    %300 = vector.broadcast %299 : vector<1x256xf32> to vector<16x256xf32>
    %301 = arith.mulf %236, %300 : vector<16x256xf32>
    %302 = arith.truncf %301 : vector<16x256xf32> to vector<16x256xbf16>
    %c1_107 = arith.constant 1 : index
    %c0_108 = arith.constant 0 : index
    %c0_109 = arith.constant 0 : index
    %303 = vector.load %arg11[%c1_107, %c0_108, %c0_109] : memref<2x256x128xbf16, #tpu.memory_space<vmem>>, vector<1x256x128xbf16>
    %304 = vector.shape_cast %303 : vector<1x256x128xbf16> to vector<256x128xbf16>
    %cst_110 = arith.constant dense<0.000000e+00> : vector<16x128xf32>
    %305 = tpu.matmul %302, %304, %cst_110 {dimension_numbers = #tpu.dot_dimension_numbers<[1], [0], [0], [1], [0, 0, 1, 1], [], []>} : vector<16x256xbf16>, vector<256x128xbf16>, vector<16x128xf32> -> vector<16x128xf32>
    %c1_111 = arith.constant 1 : index
    %c0_112 = arith.constant 0 : index
    %c0_113 = arith.constant 0 : index
    %306 = vector.load %arg12[%c1_111, %c0_112, %c0_113] : memref<2x1x128xf32, #tpu.memory_space<vmem>>, vector<1x1x128xf32>
    %307 = vector.shape_cast %306 : vector<1x1x128xf32> to vector<1x128xf32>
    %308 = vector.broadcast %307 : vector<1x128xf32> to vector<16x128xf32>
    %309 = arith.addf %305, %308 : vector<16x128xf32>
    %cst_114 = arith.constant 0.000000e+00 : f32
    %310 = vector.broadcast %cst_114 : f32 to vector<16x128xf32>
    %311 = arith.subf %310, %309 : vector<16x128xf32>
    %312 = math.exp %311 : vector<16x128xf32>
    %cst_115 = arith.constant 1.000000e+00 : f32
    %313 = vector.broadcast %cst_115 : f32 to vector<16x128xf32>
    %314 = arith.addf %313, %312 : vector<16x128xf32>
    %315 = tpu.reciprocal %314 {approx = true} : vector<16x128xf32> -> vector<16x128xf32>
    %316 = arith.mulf %309, %315 : vector<16x128xf32>
    %317 = arith.addf %316, %159 : vector<16x128xf32>
    %c0_116 = arith.constant 0 : index
    %c0_117 = arith.constant 0 : index
    %318 = vector.load %arg13[%c0_116, %c0_117] : memref<16x128xf32, #tpu.memory_space<vmem>>, vector<16x128xf32>
    tpu.vector_store %arg13[%c0_116, %c0_117], %317 {strides = array<i32>} : memref<16x128xf32, #tpu.memory_space<vmem>>, vector<16x128xf32>,
    return
  }
  func.func @transform_0(%arg0: i32) -> (i32, i32) {
    %c0_i32 = arith.constant 0 : i32
    %c0_i32_0 = arith.constant 0 : i32
    return %arg0, %c0_i32 : i32, i32
  }
  func.func @transform_1(%arg0: i32) -> (i32, i32, i32) {
    %c0_i32 = arith.constant 0 : i32
    %c0_i32_0 = arith.constant 0 : i32
    %c0_i32_1 = arith.constant 0 : i32
    %c0_i32_2 = arith.constant 0 : i32
    return %c0_i32, %c0_i32_0, %c0_i32_1 : i32, i32, i32
  }
  func.func @transform_2(%arg0: i32) -> (i32, i32, i32) {
    %c0_i32 = arith.constant 0 : i32
    %c0_i32_0 = arith.constant 0 : i32
    %c0_i32_1 = arith.constant 0 : i32
    %c0_i32_2 = arith.constant 0 : i32
    return %c0_i32, %c0_i32_0, %c0_i32_1 : i32, i32, i32
  }
  func.func @transform_3(%arg0: i32) -> (i32, i32, i32) {
    %c0_i32 = arith.constant 0 : i32
    %c0_i32_0 = arith.constant 0 : i32
    %c0_i32_1 = arith.constant 0 : i32
    %c0_i32_2 = arith.constant 0 : i32
    return %c0_i32, %c0_i32_0, %c0_i32_1 : i32, i32, i32
  }
  func.func @transform_4(%arg0: i32) -> (i32, i32, i32) {
    %c0_i32 = arith.constant 0 : i32
    %c0_i32_0 = arith.constant 0 : i32
    %c0_i32_1 = arith.constant 0 : i32
    %c0_i32_2 = arith.constant 0 : i32
    return %c0_i32, %c0_i32_0, %c0_i32_1 : i32, i32, i32
  }
  func.func @transform_5(%arg0: i32) -> (i32, i32) {
    %c0_i32 = arith.constant 0 : i32
    %c0_i32_0 = arith.constant 0 : i32
    %c0_i32_1 = arith.constant 0 : i32
    return %c0_i32, %c0_i32_0 : i32, i32
  }
  func.func @transform_6(%arg0: i32) -> (i32, i32, i32) {
    %c0_i32 = arith.constant 0 : i32
    %c0_i32_0 = arith.constant 0 : i32
    %c0_i32_1 = arith.constant 0 : i32
    %c0_i32_2 = arith.constant 0 : i32
    return %c0_i32, %c0_i32_0, %c0_i32_1 : i32, i32, i32
  }
  func.func @transform_7(%arg0: i32) -> (i32, i32, i32) {
    %c0_i32 = arith.constant 0 : i32
    %c0_i32_0 = arith.constant 0 : i32
    %c0_i32_1 = arith.constant 0 : i32
    %c0_i32_2 = arith.constant 0 : i32
    return %c0_i32, %c0_i32_0, %c0_i32_1 : i32, i32, i32
  }
  func.func @transform_8(%arg0: i32) -> (i32, i32, i32) {
    %c0_i32 = arith.constant 0 : i32
    %c0_i32_0 = arith.constant 0 : i32
    %c0_i32_1 = arith.constant 0 : i32
    %c0_i32_2 = arith.constant 0 : i32
    return %c0_i32, %c0_i32_0, %c0_i32_1 : i32, i32, i32
  }
  func.func @transform_9(%arg0: i32) -> (i32, i32, i32) {
    %c0_i32 = arith.constant 0 : i32
    %c0_i32_0 = arith.constant 0 : i32
    %c0_i32_1 = arith.constant 0 : i32
    %c0_i32_2 = arith.constant 0 : i32
    return %c0_i32, %c0_i32_0, %c0_i32_1 : i32, i32, i32
  }
  func.func @transform_10(%arg0: i32) -> (i32, i32, i32) {
    %c0_i32 = arith.constant 0 : i32
    %c0_i32_0 = arith.constant 0 : i32
    %c0_i32_1 = arith.constant 0 : i32
    %c0_i32_2 = arith.constant 0 : i32
    return %c0_i32, %c0_i32_0, %c0_i32_1 : i32, i32, i32
  }
  func.func @transform_11(%arg0: i32) -> (i32, i32, i32) {
    %c0_i32 = arith.constant 0 : i32
    %c0_i32_0 = arith.constant 0 : i32
    %c0_i32_1 = arith.constant 0 : i32
    %c0_i32_2 = arith.constant 0 : i32
    return %c0_i32, %c0_i32_0, %c0_i32_1 : i32, i32, i32
  }
  func.func @transform_12(%arg0: i32) -> (i32, i32) {
    %c0_i32 = arith.constant 0 : i32
    %c0_i32_0 = arith.constant 0 : i32
    return %arg0, %c0_i32 : i32, i32
  }
}

</mosaic_0001>

<llo_original>
// kernel: tpu_custom_call.1
$region0: #{tpu_custom_call.1}
  #allocation0 [shape = 'u32[]', space=smem, size = 0x4, offset = 0x4, fixed_abs, tag = 'smem constant byte address 0x4 - core index']
  #allocation1 [shape = 'u32[144,128]{1,0:T(1,128)}', space=vmem, size = 0x12000, scoped, tag = 'internal scratch']
  %s0 = inlined_call_operand.vmem [shape: f32[32,128], index: 0, kind: input, shape index: {}]
  %s1 = inlined_call_operand.hbm [shape: bf16[2,128,256], index: 1, kind: input, shape index: {}]
  %s2 = inlined_call_operand.vmem [shape: f32[2,1,256], index: 2, kind: input, shape index: {}]
  %s3 = inlined_call_operand.vmem [shape: f32[2,9,256], index: 3, kind: input, shape index: {}]
  %s4 = inlined_call_operand.vmem [shape: f32[2,1,256], index: 4, kind: input, shape index: {}]
  %s5 = inlined_call_operand.vmem [shape: f32[16,3], index: 5, kind: input, shape index: {}]
  %s6 = inlined_call_operand.vmem [shape: f32[2,2,16], index: 6, kind: input, shape index: {}]
  %s7 = inlined_call_operand.vmem [shape: f32[2,1,2], index: 7, kind: input, shape index: {}]
  %s8 = inlined_call_operand.vmem [shape: f32[2,2,256], index: 8, kind: input, shape index: {}]
  %s9 = inlined_call_operand.vmem [shape: f32[2,1,256], index: 9, kind: input, shape index: {}]
  %s10 = inlined_call_operand.hbm [shape: bf16[2,256,128], index: 10, kind: input, shape index: {}]
  %s11 = inlined_call_operand.vmem [shape: f32[2,1,128], index: 11, kind: input, shape index: {}]
  %s12 = inlined_call_operand.hbm [shape: f32[32,128], index: 12, kind: output, shape index: {}]
  %s13 = sld [smem:[#allocation0]]
  $region89: #{tpu_custom_call.1} parent=0
    _
  %s15 = ssub.s32 1, %s13
  %s16 = scalar_select 0, %s15, %s13
  $region1: #{tpu_custom_call.1} parent=0
    #allocation2 [shape = 'u8[131072]{0}', space=vmem, size = 0x20000, scoped, tag = 'input window, operand 1, single buffered']
    #allocation3 [shape = 's32[2]{0}', space=sflag, size = 0x8, scoped, tag = 'scoped memory for tpu_custom_call.1']
    #allocation4 [shape = 's32[2]{0}', space=sflag, size = 0x8, scoped, tag = 'scoped memory for tpu_custom_call.1']
    #allocation5 [shape = 'u8[131072]{0}', space=vmem, size = 0x20000, scoped, tag = 'input window, operand 10, single buffered']
    #allocation6 [shape = 's32[1]{0}', space=sflag, size = 0x4, scoped, tag = 'scoped memory for tpu_custom_call.1']
    #allocation7 [shape = 'u8[16384]{0}', space=vmem, size = 0x4000, scoped, tag = 'output window, operand 0']
    %17 = vsyncpa [#allocation3], 0
    %18 = vsyncpa [#allocation6], 0
    %19 = vsyncpa [#allocation4], 0
    %s20 = scalar_lea.sflag [#allocation4], 1
    %21 = vsyncpa %s20, 0
    loop: start=0, step=1, limit=4
    $region2: #{tpu_custom_call.1} parent=1 // loop_pre_header
      _
    $region3: #{tpu_custom_call.1} parent=1 // loop_header
      %s23 = sphi 0, %s27
      %p24 = scmp.ge.s32.totalorder %s23, 4
      %s33 = sphi 0, %s35
      %s36 = sphi 0, %s33
      %s37 = sphi 0, %s36
      %s53 = sphi 0, %s37
      %s57 = sphi 0, %s57
      %s59 = sphi 0, %s57
      %s60 = sphi 0, %s59
      %s74 = sphi 0, %s60
      %s78 = sphi 0, %s78
      %s80 = sphi 0, %s78
      %s81 = sphi 0, %s80
      %s95 = sphi 0, %s81
      %s99 = sphi 0, %s99
      %s101 = sphi 0, %s99
      %s102 = sphi 0, %s101
      %s116 = sphi 0, %s102
      %s120 = sphi 0, %s120
      %s122 = sphi 0, %s120
      %s123 = sphi 0, %s122
      %s137 = sphi 0, %s123
      %s141 = sphi 0, %s141
      %s143 = sphi 0, %s141
      %s144 = sphi 0, %s143
      %s158 = sphi 0, %s144
      %s162 = sphi 0, %s162
      %s164 = sphi 0, %s162
      %s165 = sphi 0, %s164
      %s179 = sphi 0, %s165
      %s183 = sphi 0, %s183
      %s185 = sphi 0, %s183
      %s186 = sphi 0, %s185
      %s200 = sphi 0, %s186
      %s204 = sphi 0, %s204
      %s206 = sphi 0, %s204
      %s207 = sphi 0, %s206
      %s221 = sphi 0, %s207
      %s225 = sphi 0, %s225
      %s227 = sphi 0, %s225
      %s228 = sphi 0, %s227
      %s242 = sphi 0, %s228
      %s246 = sphi 0, %s246
      %s248 = sphi 0, %s246
      %s249 = sphi 0, %s248
      %s263 = sphi 0, %s249
      %s267 = sphi 0, %s267
      %s269 = sphi 0, %s267
      %s270 = sphi 0, %s269
      %s284 = sphi 0, %s270
      %s290 = sphi 0, %s292
      %s293 = sphi 0, %s290
      %s294 = sphi 0, %s293
      %s310 = sphi 0, %s294
    $region4: #{tpu_custom_call.1} parent=1 // loop_header_branch
      %26 = sbr.rel (%p24) target = $region8
    $region5: #{tpu_custom_call.1} parent=1 // loop_body
      %s28 = ssub.s32 %s23, 1
      %s29 = ssub.s32 %s23, 2
      %s30 = sadd.s32 %s23, 1
      %s31 = ssub.s32 %s23, %s30
      %p32 = scmp.eq.s32.totalorder %s31, 0
      %s34 = sadd.s32 %s33, 1
      %s35 = scalar_select %p32, %s33, %s34
      %p38 = pneg %p32
      %p39 = scmp.eq.s32.totalorder %s23, 1
      %p40 = por %p38, %p39
      %p41 = scmp.ne.s32.totalorder %s33, %s36
      %p42 = scmp.eq.s32.totalorder %s23, 0
      %p43 = por %p41, %p42
      %p44 = scmp.ne.s32.totalorder %s33, %s36
      %p45 = scmp.eq.s32.totalorder %s28, 1
      %p46 = por %p44, %p45
      %p47 = scmp.ne.s32.totalorder %s36, %s37
      %p48 = scmp.eq.s32.totalorder %s28, 0
      %p49 = por %p47, %p48
      %p50 = scmp.ne.s32.totalorder %s36, %s37
      %p51 = scmp.eq.s32.totalorder %s29, 1
      %p52 = por %p50, %p51
      %p54 = scmp.ne.s32.totalorder %s37, %s53
      %p55 = scmp.eq.s32.totalorder %s29, 0
      %p56 = por %p54, %p55
      %s58 = sadd.s32 %s57, 1
      %p61 = scmp.eq.s32.totalorder %s23, 1
      %p62 = scmp.ne.s32.totalorder %s57, %s59
      %p63 = scmp.eq.s32.totalorder %s23, 0
      %p64 = por %p62, %p63
      %p65 = scmp.ne.s32.totalorder %s57, %s59
      %p66 = scmp.eq.s32.totalorder %s28, 1
      %p67 = por %p65, %p66
      %p68 = scmp.ne.s32.totalorder %s59, %s60
      %p69 = scmp.eq.s32.totalorder %s28, 0
      %p70 = por %p68, %p69
      %p71 = scmp.ne.s32.totalorder %s59, %s60
      %p72 = scmp.eq.s32.totalorder %s29, 1
      %p73 = por %p71, %p72
      %p75 = scmp.ne.s32.totalorder %s60, %s74
      %p76 = scmp.eq.s32.totalorder %s29, 0
      %p77 = por %p75, %p76
      %s79 = sadd.s32 %s78, 1
      %p82 = scmp.eq.s32.totalorder %s23, 1
      %p83 = scmp.ne.s32.totalorder %s78, %s80
      %p84 = scmp.eq.s32.totalorder %s23, 0
      %p85 = por %p83, %p84
      %p86 = scmp.ne.s32.totalorder %s78, %s80
      %p87 = scmp.eq.s32.totalorder %s28, 1
      %p88 = por %p86, %p87
      %p89 = scmp.ne.s32.totalorder %s80, %s81
      %p90 = scmp.eq.s32.totalorder %s28, 0
      %p91 = por %p89, %p90
      %p92 = scmp.ne.s32.totalorder %s80, %s81
      %p93 = scmp.eq.s32.totalorder %s29, 1
      %p94 = por %p92, %p93
      %p96 = scmp.ne.s32.totalorder %s81, %s95
      %p97 = scmp.eq.s32.totalorder %s29, 0
      %p98 = por %p96, %p97
      %s100 = sadd.s32 %s99, 1
      %p103 = scmp.eq.s32.totalorder %s23, 1
      %p104 = scmp.ne.s32.totalorder %s99, %s101
      %p105 = scmp.eq.s32.totalorder %s23, 0
      %p106 = por %p104, %p105
      %p107 = scmp.ne.s32.totalorder %s99, %s101
      %p108 = scmp.eq.s32.totalorder %s28, 1
      %p109 = por %p107, %p108
      %p110 = scmp.ne.s32.totalorder %s101, %s102
      %p111 = scmp.eq.s32.totalorder %s28, 0
      %p112 = por %p110, %p111
      %p113 = scmp.ne.s32.totalorder %s101, %s102
      %p114 = scmp.eq.s32.totalorder %s29, 1
      %p115 = por %p113, %p114
      %p117 = scmp.ne.s32.totalorder %s102, %s116
      %p118 = scmp.eq.s32.totalorder %s29, 0
      %p119 = por %p117, %p118
      %s121 = sadd.s32 %s120, 1
      %p124 = scmp.eq.s32.totalorder %s23, 1
      %p125 = scmp.ne.s32.totalorder %s120, %s122
      %p126 = scmp.eq.s32.totalorder %s23, 0
      %p127 = por %p125, %p126
      %p128 = scmp.ne.s32.totalorder %s120, %s122
      %p129 = scmp.eq.s32.totalorder %s28, 1
      %p130 = por %p128, %p129
      %p131 = scmp.ne.s32.totalorder %s122, %s123
      %p132 = scmp.eq.s32.totalorder %s28, 0
      %p133 = por %p131, %p132
      %p134 = scmp.ne.s32.totalorder %s122, %s123
      %p135 = scmp.eq.s32.totalorder %s29, 1
      %p136 = por %p134, %p135
      %p138 = scmp.ne.s32.totalorder %s123, %s137
      %p139 = scmp.eq.s32.totalorder %s29, 0
      %p140 = por %p138, %p139
      %s142 = sadd.s32 %s141, 1
      %p145 = scmp.eq.s32.totalorder %s23, 1
      %p146 = scmp.ne.s32.totalorder %s141, %s143
      %p147 = scmp.eq.s32.totalorder %s23, 0
      %p148 = por %p146, %p147
      %p149 = scmp.ne.s32.totalorder %s141, %s143
      %p150 = scmp.eq.s32.totalorder %s28, 1
      %p151 = por %p149, %p150
      %p152 = scmp.ne.s32.totalorder %s143, %s144
      %p153 = scmp.eq.s32.totalorder %s28, 0
      %p154 = por %p152, %p153
      %p155 = scmp.ne.s32.totalorder %s143, %s144
      %p156 = scmp.eq.s32.totalorder %s29, 1
      %p157 = por %p155, %p156
      %p159 = scmp.ne.s32.totalorder %s144, %s158
      %p160 = scmp.eq.s32.totalorder %s29, 0
      %p161 = por %p159, %p160
      %s163 = sadd.s32 %s162, 1
      %p166 = scmp.eq.s32.totalorder %s23, 1
      %p167 = scmp.ne.s32.totalorder %s162, %s164
      %p168 = scmp.eq.s32.totalorder %s23, 0
      %p169 = por %p167, %p168
      %p170 = scmp.ne.s32.totalorder %s162, %s164
      %p171 = scmp.eq.s32.totalorder %s28, 1
      %p172 = por %p170, %p171
      %p173 = scmp.ne.s32.totalorder %s164, %s165
      %p174 = scmp.eq.s32.totalorder %s28, 0
      %p175 = por %p173, %p174
      %p176 = scmp.ne.s32.totalorder %s164, %s165
      %p177 = scmp.eq.s32.totalorder %s29, 1
      %p178 = por %p176, %p177
      %p180 = scmp.ne.s32.totalorder %s165, %s179
      %p181 = scmp.eq.s32.totalorder %s29, 0
      %p182 = por %p180, %p181
      %s184 = sadd.s32 %s183, 1
      %p187 = scmp.eq.s32.totalorder %s23, 1
      %p188 = scmp.ne.s32.totalorder %s183, %s185
      %p189 = scmp.eq.s32.totalorder %s23, 0
      %p190 = por %p188, %p189
      %p191 = scmp.ne.s32.totalorder %s183, %s185
      %p192 = scmp.eq.s32.totalorder %s28, 1
      %p193 = por %p191, %p192
      %p194 = scmp.ne.s32.totalorder %s185, %s186
      %p195 = scmp.eq.s32.totalorder %s28, 0
      %p196 = por %p194, %p195
      %p197 = scmp.ne.s32.totalorder %s185, %s186
      %p198 = scmp.eq.s32.totalorder %s29, 1
      %p199 = por %p197, %p198
      %p201 = scmp.ne.s32.totalorder %s186, %s200
      %p202 = scmp.eq.s32.totalorder %s29, 0
      %p203 = por %p201, %p202
      %s205 = sadd.s32 %s204, 1
      %p208 = scmp.eq.s32.totalorder %s23, 1
      %p209 = scmp.ne.s32.totalorder %s204, %s206
      %p210 = scmp.eq.s32.totalorder %s23, 0
      %p211 = por %p209, %p210
      %p212 = scmp.ne.s32.totalorder %s204, %s206
      %p213 = scmp.eq.s32.totalorder %s28, 1
      %p214 = por %p212, %p213
      %p215 = scmp.ne.s32.totalorder %s206, %s207
      %p216 = scmp.eq.s32.totalorder %s28, 0
      %p217 = por %p215, %p216
      %p218 = scmp.ne.s32.totalorder %s206, %s207
      %p219 = scmp.eq.s32.totalorder %s29, 1
      %p220 = por %p218, %p219
      %p222 = scmp.ne.s32.totalorder %s207, %s221
      %p223 = scmp.eq.s32.totalorder %s29, 0
      %p224 = por %p222, %p223
      %s226 = sadd.s32 %s225, 1
      %p229 = scmp.eq.s32.totalorder %s23, 1
      %p230 = scmp.ne.s32.totalorder %s225, %s227
      %p231 = scmp.eq.s32.totalorder %s23, 0
      %p232 = por %p230, %p231
      %p233 = scmp.ne.s32.totalorder %s225, %s227
      %p234 = scmp.eq.s32.totalorder %s28, 1
      %p235 = por %p233, %p234
      %p236 = scmp.ne.s32.totalorder %s227, %s228
      %p237 = scmp.eq.s32.totalorder %s28, 0
      %p238 = por %p236, %p237
      %p239 = scmp.ne.s32.totalorder %s227, %s228
      %p240 = scmp.eq.s32.totalorder %s29, 1
      %p241 = por %p239, %p240
      %p243 = scmp.ne.s32.totalorder %s228, %s242
      %p244 = scmp.eq.s32.totalorder %s29, 0
      %p245 = por %p243, %p244
      %s247 = sadd.s32 %s246, 1
      %p250 = scmp.eq.s32.totalorder %s23, 1
      %p251 = scmp.ne.s32.totalorder %s246, %s248
      %p252 = scmp.eq.s32.totalorder %s23, 0
      %p253 = por %p251, %p252
      %p254 = scmp.ne.s32.totalorder %s246, %s248
      %p255 = scmp.eq.s32.totalorder %s28, 1
      %p256 = por %p254, %p255
      %p257 = scmp.ne.s32.totalorder %s248, %s249
      %p258 = scmp.eq.s32.totalorder %s28, 0
      %p259 = por %p257, %p258
      %p260 = scmp.ne.s32.totalorder %s248, %s249
      %p261 = scmp.eq.s32.totalorder %s29, 1
      %p262 = por %p260, %p261
      %p264 = scmp.ne.s32.totalorder %s249, %s263
      %p265 = scmp.eq.s32.totalorder %s29, 0
      %p266 = por %p264, %p265
      %s268 = sadd.s32 %s267, 1
      %p271 = scmp.eq.s32.totalorder %s23, 1
      %p272 = scmp.ne.s32.totalorder %s267, %s269
      %p273 = scmp.eq.s32.totalorder %s23, 0
      %p274 = por %p272, %p273
      %p275 = scmp.ne.s32.totalorder %s267, %s269
      %p276 = scmp.eq.s32.totalorder %s28, 1
      %p277 = por %p275, %p276
      %p278 = scmp.ne.s32.totalorder %s269, %s270
      %p279 = scmp.eq.s32.totalorder %s28, 0
      %p280 = por %p278, %p279
      %p281 = scmp.ne.s32.totalorder %s269, %s270
      %p282 = scmp.eq.s32.totalorder %s29, 1
      %p283 = por %p281, %p282
      %p285 = scmp.ne.s32.totalorder %s270, %s284
      %p286 = scmp.eq.s32.totalorder %s29, 0
      %p287 = por %p285, %p286
      %s288 = ssub.s32 %s23, %s30
      %p289 = scmp.eq.s32.totalorder %s288, 0
      %s291 = sadd.s32 %s290, 1
      %s292 = scalar_select %p289, %s290, %s291
      %p295 = pneg %p289
      %p296 = scmp.eq.s32.totalorder %s23, 1
      %p297 = por %p295, %p296
      %p298 = scmp.ne.s32.totalorder %s290, %s293
      %p299 = scmp.eq.s32.totalorder %s23, 0
      %p300 = por %p298, %p299
      %p301 = scmp.ne.s32.totalorder %s290, %s293
      %p302 = scmp.eq.s32.totalorder %s28, 1
      %p303 = por %p301, %p302
      %p304 = scmp.ne.s32.totalorder %s293, %s294
      %p305 = scmp.eq.s32.totalorder %s28, 0
      %p306 = por %p304, %p305
      %p307 = scmp.ne.s32.totalorder %s293, %s294
      %p308 = scmp.eq.s32.totalorder %s29, 1
      %p309 = por %p307, %p308
      %p311 = scmp.ne.s32.totalorder %s294, %s310
      %p312 = scmp.eq.s32.totalorder %s29, 0
      %p313 = por %p311, %p312
      %p314 = scmp.le.s32.totalorder 1, %s23
      %p315 = scmp.lt.s32.totalorder %s23, 3
      %p316 = pnand %p314, %p315
      %p317 = pneg %p316
      // Predicated region
      $region9: #{tpu_custom_call.1} parent=5 // pred_check
        _
      $region10: #{tpu_custom_call.1} parent=5 // pred_check_branch
        %319 = sbr.rel (%p316) target = $region12
      $region11: #{tpu_custom_call.1} parent=5 // pred_region
        %s320 = ssub.s32 %s23, 1
        // Predicated region
        $region13: #{tpu_custom_call.1} parent=11 // pred_check
          %p321 = pneg %p70
        $region14: #{tpu_custom_call.1} parent=11 // pred_check_branch
          %323 = sbr.rel (%p321) target = $region16
        $region15: #{tpu_custom_call.1} parent=11 // pred_region
          %s325 = ssub.s32 4096, 4096
          %326 = vsyncadd [#allocation3], %s325
          %s327 = sshll.u32 [#allocation2], 4
          %s328 = int_to_ptr.vmem [resolvable:$true] %s327
          %333 = dma.hbm_to_vmem [thread:$0]  %s1, 4096, %s328, [#allocation3], 128, 128, 8
        $region16: #{tpu_custom_call.1} parent=11 // pred_fallthru
          _
        // Predicated region
        $region17: #{tpu_custom_call.1} parent=11 // pred_check
          %p334 = pneg %p91
        $region18: #{tpu_custom_call.1} parent=11 // pred_check_branch
          %336 = sbr.rel (%p334) target = $region20
        $region19: #{tpu_custom_call.1} parent=11 // pred_region
          _
        $region20: #{tpu_custom_call.1} parent=11 // pred_fallthru
          _
        // Predicated region
        $region21: #{tpu_custom_call.1} parent=11 // pred_check
          %p337 = pneg %p112
        $region22: #{tpu_custom_call.1} parent=11 // pred_check_branch
          %339 = sbr.rel (%p337) target = $region24
        $region23: #{tpu_custom_call.1} parent=11 // pred_region
          _
        $region24: #{tpu_custom_call.1} parent=11 // pred_fallthru
          _
        // Predicated region
        $region25: #{tpu_custom_call.1} parent=11 // pred_check
          %p340 = pneg %p133
        $region26: #{tpu_custom_call.1} parent=11 // pred_check_branch
          %342 = sbr.rel (%p340) target = $region28
        $region27: #{tpu_custom_call.1} parent=11 // pred_region
          _
        $region28: #{tpu_custom_call.1} parent=11 // pred_fallthru
          _
        // Predicated region
        $region29: #{tpu_custom_call.1} parent=11 // pred_check
          %p343 = pneg %p154
        $region30: #{tpu_custom_call.1} parent=11 // pred_check_branch
          %345 = sbr.rel (%p343) target = $region32
        $region31: #{tpu_custom_call.1} parent=11 // pred_region
          _
        $region32: #{tpu_custom_call.1} parent=11 // pred_fallthru
          _
        // Predicated region
        $region33: #{tpu_custom_call.1} parent=11 // pred_check
          %p346 = pneg %p175
        $region34: #{tpu_custom_call.1} parent=11 // pred_check_branch
          %348 = sbr.rel (%p346) target = $region36
        $region35: #{tpu_custom_call.1} parent=11 // pred_region
          _
        $region36: #{tpu_custom_call.1} parent=11 // pred_fallthru
          _
        // Predicated region
        $region37: #{tpu_custom_call.1} parent=11 // pred_check
          %p349 = pneg %p196
        $region38: #{tpu_custom_call.1} parent=11 // pred_check_branch
          %351 = sbr.rel (%p349) target = $region40
        $region39: #{tpu_custom_call.1} parent=11 // pred_region
          _
        $region40: #{tpu_custom_call.1} parent=11 // pred_fallthru
          _
        // Predicated region
        $region41: #{tpu_custom_call.1} parent=11 // pred_check
          %p352 = pneg %p217
        $region42: #{tpu_custom_call.1} parent=11 // pred_check_branch
          %354 = sbr.rel (%p352) target = $region44
        $region43: #{tpu_custom_call.1} parent=11 // pred_region
          _
        $region44: #{tpu_custom_call.1} parent=11 // pred_fallthru
          _
        // Predicated region
        $region45: #{tpu_custom_call.1} parent=11 // pred_check
          %p355 = pneg %p238
        $region46: #{tpu_custom_call.1} parent=11 // pred_check_branch
          %357 = sbr.rel (%p355) target = $region48
        $region47: #{tpu_custom_call.1} parent=11 // pred_region
          _
        $region48: #{tpu_custom_call.1} parent=11 // pred_fallthru
          _
        // Predicated region
        $region49: #{tpu_custom_call.1} parent=11 // pred_check
          %p358 = pneg %p259
        $region50: #{tpu_custom_call.1} parent=11 // pred_check_branch
          %360 = sbr.rel (%p358) target = $region52
        $region51: #{tpu_custom_call.1} parent=11 // pred_region
          %s362 = ssub.s32 4096, 4096
          %363 = vsyncadd [#allocation6], %s362
          %s364 = sshll.u32 [#allocation5], 4
          %s365 = int_to_ptr.vmem [resolvable:$true] %s364
          %370 = dma.hbm_to_vmem [thread:$0]  %s10, 4096, %s365, [#allocation6], 64, 64, 4
        $region52: #{tpu_custom_call.1} parent=11 // pred_fallthru
          _
        // Predicated region
        $region53: #{tpu_custom_call.1} parent=11 // pred_check
          %p371 = pneg %p280
        $region54: #{tpu_custom_call.1} parent=11 // pred_check_branch
          %373 = sbr.rel (%p371) target = $region56
        $region55: #{tpu_custom_call.1} parent=11 // pred_region
          _
        $region56: #{tpu_custom_call.1} parent=11 // pred_fallthru
          _
      $region12: #{tpu_custom_call.1} parent=5 // pred_fallthru
        _
      %p374 = scmp.lt.s32.totalorder %s23, 2
      // Predicated region
      $region57: #{tpu_custom_call.1} parent=5 // pred_check
        %p375 = pneg %p374
      $region58: #{tpu_custom_call.1} parent=5 // pred_check_branch
        %377 = sbr.rel (%p375) target = $region60
      $region59: #{tpu_custom_call.1} parent=5 // pred_region
        // Predicated region
        $region61: #{tpu_custom_call.1} parent=59 // pred_check
          %p378 = pneg %p43
        $region62: #{tpu_custom_call.1} parent=59 // pred_check_branch
          %380 = sbr.rel (%p378) target = $region64
        $region63: #{tpu_custom_call.1} parent=59 // pred_region
          %s381 = smul.u32 2, %s23
          %p382 = scmp.lt.s32.totalorder %s381, 3
          %s383 = scalar_select %p382, %s381, 3
          %s384 = smul.addr %s383, 8
          %s385 = scalar_lea.vmem %s0, %s384
          %s386 = smul.u32 2, %s23
        $region64: #{tpu_custom_call.1} parent=59 // pred_fallthru
          _
      $region60: #{tpu_custom_call.1} parent=5 // pred_fallthru
        _
      %p387 = scmp.le.s32.totalorder 1, %s23
      %p388 = scmp.lt.s32.totalorder %s23, 3
      %p389 = pnand %p387, %p388
      %p390 = pneg %p389
      // Predicated region
      $region65: #{tpu_custom_call.1} parent=5 // pred_check
        _
      $region66: #{tpu_custom_call.1} parent=5 // pred_check_branch
        %392 = sbr.rel (%p389) target = $region68
      $region67: #{tpu_custom_call.1} parent=5 // pred_region
        %s393 = ssub.s32 %s23, 1
        // Predicated region
        $region69: #{tpu_custom_call.1} parent=67 // pred_check
          %p394 = pneg %p70
        $region70: #{tpu_custom_call.1} parent=67 // pred_check_branch
          %396 = sbr.rel (%p394) target = $region72
        $region71: #{tpu_custom_call.1} parent=67 // pred_region
          %397 = dma.done [#allocation3], 4096
        $region72: #{tpu_custom_call.1} parent=67 // pred_fallthru
          _
        // Predicated region
        $region73: #{tpu_custom_call.1} parent=67 // pred_check
          %p398 = pneg %p259
        $region74: #{tpu_custom_call.1} parent=67 // pred_check_branch
          %400 = sbr.rel (%p398) target = $region76
        $region75: #{tpu_custom_call.1} parent=67 // pred_region
          %401 = dma.done [#allocation6], 4096
        $region76: #{tpu_custom_call.1} parent=67 // pred_fallthru
          _
        %s402 = smul.u32 2, %s28
        %p403 = scmp.lt.s32.totalorder %s402, 3
        %s404 = scalar_select %p403, %s402, 3
        %s405 = smul.addr %s404, 8
        %s406 = scalar_lea.vmem %s0, %s405
        %p407 = pneg %p49
        %p408 = pneg %p46
        %p409 = pneg %p70
        %p410 = pneg %p67
        %p411 = pneg %p91
        %p412 = pneg %p88
        %p413 = pneg %p112
        %p414 = pneg %p109
        %p415 = pneg %p133
        %p416 = pneg %p130
        %p417 = pneg %p154
        %p418 = pneg %p151
        %p419 = pneg %p175
        %p420 = pneg %p172
        %p421 = pneg %p196
        %p422 = pneg %p193
        %p423 = pneg %p217
        %p424 = pneg %p214
        %p425 = pneg %p238
        %p426 = pneg %p235
        %p427 = pneg %p259
        %p428 = pneg %p256
        %p429 = pneg %p280
        %p430 = pneg %p277
        %p431 = pneg %p306
        %p432 = pneg %p303
        %s433 = sand.u32 %s293, 1
        %s434 = scalar_lea.sflag [#allocation4], %s433
        %s435 = sand.u32 %s293, 1
        %s436 = smul.addr %s435, 16
        %s437 = scalar_lea.vmem [#allocation7], %s436
        %s438 = smul.u32 2, %s28
        %p439 = scmp.lt.s32.totalorder %s438, 3
        %s440 = scalar_select %p439, %s438, 3
        %s441 = smul.addr %s440, 8
        %s442 = scalar_lea.vmem %s0, %s441
        %s443 = smul.u32 2, %s28
        %s444 = smul.u32 2, %s28
        %v446 = vld [vmem:[%s5] sm:$0xff]
        %v447 = vld [vmem:[%s5 + $0x8] sm:$0xff]
        %v448 = vld [vmem:[%s442] sm:$0xff]
        %v449 = vld [vmem:[%s442 + $0x8] sm:$0xff]
        %v450 = vpack.c.bf16 %v449, %v448
        %v451 = vld [vmem:[#allocation2] sm:$0xff]
        %v452 = vld [vmem:[#allocation2 + $0x8] sm:$0xff]
        %v453 = vld [vmem:[#allocation2 + $0x10] sm:$0xff]
        %v454 = vld [vmem:[#allocation2 + $0x18] sm:$0xff]
        %v455 = vld [vmem:[#allocation2 + $0x20] sm:$0xff]
        %v456 = vld [vmem:[#allocation2 + $0x28] sm:$0xff]
        %v457 = vld [vmem:[#allocation2 + $0x30] sm:$0xff]
        %v458 = vld [vmem:[#allocation2 + $0x38] sm:$0xff]
        %v459 = vld [vmem:[#allocation2 + $0x40] sm:$0xff]
        %v460 = vld [vmem:[#allocation2 + $0x48] sm:$0xff]
        %v461 = vld [vmem:[#allocation2 + $0x50] sm:$0xff]
        %v462 = vld [vmem:[#allocation2 + $0x58] sm:$0xff]
        %v463 = vld [vmem:[#allocation2 + $0x60] sm:$0xff]
        %v464 = vld [vmem:[#allocation2 + $0x68] sm:$0xff]
        %v465 = vld [vmem:[#allocation2 + $0x70] sm:$0xff]
        %v466 = vld [vmem:[#allocation2 + $0x78] sm:$0xff]
        %v467 = vld [vmem:[%s2] sm:$0x3]
        %v469 = vlaneseq
        %v470 = vshrl.u32 %v469, 7
        %v471 = vsub.s32 0, %v470
        %v472 = vrot.slane %v467, %v471
        %v473 = vlaneseq
        %v474 = vshrl.u32 %v473, 7
        %v475 = vsub.s32 1, %v474
        %v476 = vrot.slane %v467, %v475
        %v495 = vunpack.c.l.b16 %v451
        %v496 = vunpack.c.h.b16 %v451
        %v497 = vunpack.c.l.b16 %v452
        %v498 = vunpack.c.h.b16 %v452
        %v499 = vunpack.c.l.b16 %v453
        %v500 = vunpack.c.h.b16 %v453
        %v501 = vunpack.c.l.b16 %v454
        %v502 = vunpack.c.h.b16 %v454
        %v503 = vunpack.c.l.b16 %v455
        %v504 = vunpack.c.h.b16 %v455
        %v505 = vunpack.c.l.b16 %v456
        %v506 = vunpack.c.h.b16 %v456
        %v507 = vunpack.c.l.b16 %v457
        %v508 = vunpack.c.h.b16 %v457
        %v509 = vunpack.c.l.b16 %v458
        %v510 = vunpack.c.h.b16 %v458
        %v511 = vunpack.c.l.b16 %v459
        %v512 = vunpack.c.h.b16 %v459
        %v513 = vunpack.c.l.b16 %v460
        %v514 = vunpack.c.h.b16 %v460
        %v515 = vunpack.c.l.b16 %v461
        %v516 = vunpack.c.h.b16 %v461
        %v517 = vunpack.c.l.b16 %v462
        %v518 = vunpack.c.h.b16 %v462
        %v519 = vunpack.c.l.b16 %v463
        %v520 = vunpack.c.h.b16 %v463
        %v521 = vunpack.c.l.b16 %v464
        %v522 = vunpack.c.h.b16 %v464
        %v523 = vunpack.c.l.b16 %v465
        %v524 = vunpack.c.h.b16 %v465
        %v525 = vunpack.c.l.b16 %v466
        %v526 = vunpack.c.h.b16 %v466
        %v527 = vpack.c.b16 %v497, %v495
        %v528 = vpack.c.b16 %v498, %v496
        %v529 = vpack.c.b16 %v501, %v499
        %v530 = vpack.c.b16 %v502, %v500
        %v531 = vpack.c.b16 %v505, %v503
        %v532 = vpack.c.b16 %v506, %v504
        %v533 = vpack.c.b16 %v509, %v507
        %v534 = vpack.c.b16 %v510, %v508
        %v535 = vpack.c.b16 %v513, %v511
        %v536 = vpack.c.b16 %v514, %v512
        %v537 = vpack.c.b16 %v517, %v515
        %v538 = vpack.c.b16 %v518, %v516
        %v539 = vpack.c.b16 %v521, %v519
        %v540 = vpack.c.b16 %v522, %v520
        %v541 = vpack.c.b16 %v525, %v523
        %v542 = vpack.c.b16 %v526, %v524
        %559 = vmatprep.subr.bf16.mxu0 %v528
        %560 = vmatpush1.bf16.msra.mxu0 %v527
        %561 = vmatprep.subr.bf16.mxu0 %v530
        %562 = vmatpush1.bf16.msra.mxu0 %v529
        %563 = vmatprep.subr.bf16.mxu0 %v532
        %564 = vmatpush1.bf16.msra.mxu0 %v531
        %565 = vmatprep.subr.bf16.mxu0 %v534
        %566 = vmatpush1.bf16.msra.mxu0 %v533
        %567 = vmatprep.subr.bf16.mxu0 %v536
        %568 = vmatpush1.bf16.msra.mxu0 %v535
        %569 = vmatprep.subr.bf16.mxu0 %v538
        %570 = vmatpush1.bf16.msra.mxu0 %v537
        %571 = vmatprep.subr.bf16.mxu0 %v540
        %572 = vmatpush1.bf16.msra.mxu0 %v539
        %573 = vmatprep.subr.bf16.mxu0 %v542
        %574 = vmatpush1.bf16.msra.mxu0 %v541
        %575 = vmatprep.subr.bf16.mxu0 0
        %576 = vmatpush1.bf16.msra.mxu0 0
        %577 = vmatprep.subr.bf16.mxu0 0
        %578 = vmatpush1.bf16.msra.mxu0 0
        %579 = vmatprep.subr.bf16.mxu0 0
        %580 = vmatpush1.bf16.msra.mxu0 0
        %581 = vmatprep.subr.bf16.mxu0 0
        %582 = vmatpush1.bf16.msra.mxu0 0
        %583 = vmatprep.subr.bf16.mxu0 0
        %584 = vmatpush1.bf16.msra.mxu0 0
        %585 = vmatprep.subr.bf16.mxu0 0
        %586 = vmatpush1.bf16.msra.mxu0 0
        %587 = vmatprep.subr.bf16.mxu0 0
        %588 = vmatpush1.bf16.msra.mxu0 0
        %589 = vmatprep.subr.bf16.mxu0 0
        %590 = vmatpush1.bf16.msra.mxu0 0
        %591 = vmatprep.mubr.bf16.mxu0 0
        %592 = vmatmul.mubr.bf16.gmra.mrb[0].mxu0 %v450
        %v593 = vpop.f32.mrb[0].mxu0
        %v594 = vadd.f32 %v472, %v593
        %v595 = vpop.f32.mrb[0].mxu0
        %v596 = vadd.f32 %v476, %v595
        %v597 = vpop.f32.mrb[0].mxu0
        %v598 = vadd.f32 %v472, %v597
        %v599 = vpop.f32.mrb[0].mxu0
        %v600 = vadd.f32 %v476, %v599
        %601 = vdwg.mxu0
        %v602 = vsub.f32 0.0, %v594
        %v603 = vsub.f32 0.0, %v596
        %v604 = vsub.f32 0.0, %v598
        %v605 = vsub.f32 0.0, %v600
        %v606 = vmul.f32 %v602, 1.442695
        %v607 = vpow.pop %v606
        %v608 = vmul.f32 %v603, 1.442695
        %v609 = vpow.pop %v608
        %v610 = vmul.f32 %v604, 1.442695
        %v611 = vpow.pop %v610
        %v612 = vmul.f32 %v605, 1.442695
        %v613 = vpow.pop %v612
        %v614 = vadd.f32 %v607, 1.0
        %v615 = vadd.f32 %v609, 1.0
        %v616 = vadd.f32 %v611, 1.0
        %v617 = vadd.f32 %v613, 1.0
        %v618 = vrcp.pop %v614
        %v619 = vrcp.pop %v615
        %v620 = vrcp.pop %v616
        %v621 = vrcp.pop %v617
        %v622 = vmul.f32 %v594, %v618
        %v623 = vmul.f32 %v596, %v619
        %v624 = vmul.f32 %v598, %v620
        %v625 = vmul.f32 %v600, %v621
        %v626 = vld [vmem:[%s3] sm:$0xff]
        %v627 = vld [vmem:[%s3 + $0x8] sm:$0xff]
        %v628 = vld [vmem:[%s3 + $0x10] sm:$0x1]
        %v629 = vld [vmem:[%s3 + $0x18] sm:$0x1]
        %v630 = vlaneseq
        %v631 = vshrl.u32 %v630, 7
        %v632 = vsub.s32 4, %v631
        %v633 = vrot.slane %v626, %v632
        %v634 = vlaneseq
        %v635 = vshrl.u32 %v634, 7
        %v636 = vsub.s32 4, %v635
        %v637 = vrot.slane %v627, %v636
        %v638 = vmul.f32 %v622, %v633
        %v639 = vmul.f32 %v623, %v637
        %v640 = vmul.f32 %v624, %v633
        %v641 = vmul.f32 %v625, %v637
        %v642 = vrot.slane %v622, 7
        %v643 = vrot.slane %v623, 7
        %v644 = vrot.slane %v624, 7
        %v645 = vrot.slane %v625, 7
        %v646 = vlaneseq
        %v647 = vshrl.u32 %v646, 7
        %vm648 = vcmp.lt.s32.totalorder %v647, 1
        %v649 = vsel %vm648, %v642, %v644
        %v650 = vsel %vm648, %v643, %v645
        %v651 = vsel %vm648, %v644, %v642
        %v652 = vsel %vm648, %v645, %v643
        %654 = vset.pattern.permute.xlu0 0
        %655 = vperm.xlu0 %654, %v446
        %v656 = vpop.permute.xlu0 %655
        %659 = vset.pattern.permute.xlu0 0
        %660 = vperm.xlu0 %659, %v447
        %v661 = vpop.permute.xlu0 %660
        %v663 = vmul.f32 %v651, %v656
        %v664 = vmul.f32 %v652, %v656
        %v665 = vmul.f32 %v649, %v661
        %v666 = vmul.f32 %v650, %v661
        %667 = vrot.lane.b32.xlu0 %v663, 16
        %v668 = vpop.permute.xlu0 %667
        %669 = vrot.lane.b32.xlu0 %v665, 16
        %v670 = vpop.permute.xlu0 %669
        %671 = vrot.lane.b32.xlu0 %v664, 16
        %v672 = vpop.permute.xlu0 %671
        %673 = vrot.lane.b32.xlu0 %v666, 16
        %v674 = vpop.permute.xlu0 %673
        %v675 = vlaneseq
        %v676 = vand.u32 %v675, 127
        %vm677 = vcmp.lt.s32.totalorder %v676, 16
        %v678 = vsel %vm677, %v668, %v672
        %v679 = vsel %vm677, %v670, %v674
        %v680 = vsel %vm677, %v672, %v668
        %v681 = vsel %vm677, %v674, %v670
        %v682 = vlaneseq
        %v683 = vshrl.u32 %v682, 7
        %v684 = vsub.s32 0, %v683
        %v685 = vrot.slane %v626, %v684
        %v686 = vlaneseq
        %v687 = vshrl.u32 %v686, 7
        %v688 = vsub.s32 0, %v687
        %v689 = vrot.slane %v627, %v688
        %v690 = vmul.f32 %v680, %v685
        %v691 = vmul.f32 %v678, %v689
        %v692 = vmul.f32 %v681, %v685
        %v693 = vmul.f32 %v679, %v689
        %v694 = vadd.f32 %v638, %v690
        %v695 = vadd.f32 %v639, %v691
        %v696 = vadd.f32 %v640, %v692
        %v697 = vadd.f32 %v641, %v693
        %v698 = vlaneseq
        %v699 = vshrl.u32 %v698, 7
        %v700 = vsub.s32 1, %v699
        %v701 = vrot.slane %v626, %v700
        %v702 = vlaneseq
        %v703 = vshrl.u32 %v702, 7
        %v704 = vsub.s32 1, %v703
        %v705 = vrot.slane %v627, %v704
        %v706 = vmul.f32 %v663, %v701
        %v707 = vmul.f32 %v664, %v705
        %v708 = vmul.f32 %v665, %v701
        %v709 = vmul.f32 %v666, %v705
        %v710 = vadd.f32 %v694, %v706
        %v711 = vadd.f32 %v695, %v707
        %v712 = vadd.f32 %v696, %v708
        %v713 = vadd.f32 %v697, %v709
        %714 = vrot.lane.b32.xlu0 %v663, 112
        %v715 = vpop.permute.xlu0 %714
        %716 = vrot.lane.b32.xlu0 %v665, 112
        %v717 = vpop.permute.xlu0 %716
        %718 = vrot.lane.b32.xlu0 %v664, 112
        %v719 = vpop.permute.xlu0 %718
        %720 = vrot.lane.b32.xlu0 %v666, 112
        %v721 = vpop.permute.xlu0 %720
        %vm722 = vcmp.lt.s32.totalorder %v676, 112
        %v723 = vsel %vm722, %v715, %v719
        %v724 = vsel %vm722, %v717, %v721
        %v725 = vsel %vm722, %v719, %v715
        %v726 = vsel %vm722, %v721, %v717
        %v727 = vlaneseq
        %v728 = vshrl.u32 %v727, 7
        %v729 = vsub.s32 2, %v728
        %v730 = vrot.slane %v626, %v729
        %v731 = vlaneseq
        %v732 = vshrl.u32 %v731, 7
        %v733 = vsub.s32 2, %v732
        %v734 = vrot.slane %v627, %v733
        %v735 = vmul.f32 %v723, %v730
        %v736 = vmul.f32 %v725, %v734
        %v737 = vmul.f32 %v724, %v730
        %v738 = vmul.f32 %v726, %v734
        %v739 = vadd.f32 %v710, %v735
        %v740 = vadd.f32 %v711, %v736
        %v741 = vadd.f32 %v712, %v737
        %v742 = vadd.f32 %v713, %v738
        %743 = vrot.lane.b32.xlu0 %v622, 16
        %v744 = vpop.permute.xlu0 %743
        %745 = vrot.lane.b32.xlu0 %v624, 16
        %v746 = vpop.permute.xlu0 %745
        %747 = vrot.lane.b32.xlu0 %v623, 16
        %v748 = vpop.permute.xlu0 %747
        %749 = vrot.lane.b32.xlu0 %v625, 16
        %v750 = vpop.permute.xlu0 %749
        %v751 = vsel %vm677, %v744, %v748
        %v752 = vsel %vm677, %v746, %v750
        %v753 = vsel %vm677, %v748, %v744
        %v754 = vsel %vm677, %v750, %v746
        %v755 = vlaneseq
        %v756 = vshrl.u32 %v755, 7
        %v757 = vsub.s32 3, %v756
        %v758 = vrot.slane %v626, %v757
        %v759 = vlaneseq
        %v760 = vshrl.u32 %v759, 7
        %v761 = vsub.s32 3, %v760
        %v762 = vrot.slane %v627, %v761
        %v763 = vmul.f32 %v753, %v758
        %v764 = vmul.f32 %v751, %v762
        %v765 = vmul.f32 %v754, %v758
        %v766 = vmul.f32 %v752, %v762
        %v767 = vadd.f32 %v739, %v763
        %v768 = vadd.f32 %v740, %v764
        %v769 = vadd.f32 %v741, %v765
        %v770 = vadd.f32 %v742, %v766
        %771 = vrot.lane.b32.xlu0 %v622, 112
        %v772 = vpop.permute.xlu0 %771
        %773 = vrot.lane.b32.xlu0 %v624, 112
        %v774 = vpop.permute.xlu0 %773
        %775 = vrot.lane.b32.xlu0 %v623, 112
        %v776 = vpop.permute.xlu0 %775
        %777 = vrot.lane.b32.xlu0 %v625, 112
        %v778 = vpop.permute.xlu0 %777
        %v779 = vsel %vm722, %v772, %v776
        %v780 = vsel %vm722, %v774, %v778
        %v781 = vsel %vm722, %v776, %v772
        %v782 = vsel %vm722, %v778, %v774
        %v783 = vlaneseq
        %v784 = vshrl.u32 %v783, 7
        %v785 = vsub.s32 5, %v784
        %v786 = vrot.slane %v626, %v785
        %v787 = vlaneseq
        %v788 = vshrl.u32 %v787, 7
        %v789 = vsub.s32 5, %v788
        %v790 = vrot.slane %v627, %v789
        %v791 = vmul.f32 %v779, %v786
        %v792 = vmul.f32 %v781, %v790
        %v793 = vmul.f32 %v780, %v786
        %v794 = vmul.f32 %v782, %v790
        %v795 = vadd.f32 %v767, %v791
        %v796 = vadd.f32 %v768, %v792
        %v797 = vadd.f32 %v769, %v793
        %v798 = vadd.f32 %v770, %v794
        %v799 = vrot.slane %v622, 1
        %v800 = vrot.slane %v623, 1
        %v801 = vrot.slane %v624, 1
        %v802 = vrot.slane %v625, 1
        %vm803 = vcmp.lt.s32.totalorder %v647, 7
        %v804 = vsel %vm803, %v799, %v801
        %v805 = vsel %vm803, %v800, %v802
        %v806 = vsel %vm803, %v801, %v799
        %v807 = vsel %vm803, %v802, %v800
        %808 = vset.pattern.permute.xlu0 2
        %809 = vperm.xlu0 %808, %v446
        %v810 = vpop.permute.xlu0 %809
        %812 = vset.pattern.permute.xlu0 2
        %813 = vperm.xlu0 %812, %v447
        %v814 = vpop.permute.xlu0 %813
        %v816 = vmul.f32 %v804, %v810
        %v817 = vmul.f32 %v805, %v810
        %v818 = vmul.f32 %v806, %v814
        %v819 = vmul.f32 %v807, %v814
        %820 = vrot.lane.b32.xlu0 %v816, 16
        %v821 = vpop.permute.xlu0 %820
        %822 = vrot.lane.b32.xlu0 %v818, 16
        %v823 = vpop.permute.xlu0 %822
        %824 = vrot.lane.b32.xlu0 %v817, 16
        %v825 = vpop.permute.xlu0 %824
        %826 = vrot.lane.b32.xlu0 %v819, 16
        %v827 = vpop.permute.xlu0 %826
        %v828 = vsel %vm677, %v821, %v825
        %v829 = vsel %vm677, %v823, %v827
        %v830 = vsel %vm677, %v825, %v821
        %v831 = vsel %vm677, %v827, %v823
        %v832 = vlaneseq
        %v833 = vshrl.u32 %v832, 7
        %v834 = vsub.s32 6, %v833
        %v835 = vrot.slane %v626, %v834
        %v836 = vlaneseq
        %v837 = vshrl.u32 %v836, 7
        %v838 = vsub.s32 6, %v837
        %v839 = vrot.slane %v627, %v838
        %v840 = vmul.f32 %v830, %v835
        %v841 = vmul.f32 %v828, %v839
        %v842 = vmul.f32 %v831, %v835
        %v843 = vmul.f32 %v829, %v839
        %v844 = vadd.f32 %v795, %v840
        %v845 = vadd.f32 %v796, %v841
        %v846 = vadd.f32 %v797, %v842
        %v847 = vadd.f32 %v798, %v843
        %v848 = vlaneseq
        %v849 = vshrl.u32 %v848, 7
        %v850 = vsub.s32 7, %v849
        %v851 = vrot.slane %v626, %v850
        %v852 = vlaneseq
        %v853 = vshrl.u32 %v852, 7
        %v854 = vsub.s32 7, %v853
        %v855 = vrot.slane %v627, %v854
        %v856 = vmul.f32 %v816, %v851
        %v857 = vmul.f32 %v817, %v855
        %v858 = vmul.f32 %v818, %v851
        %v859 = vmul.f32 %v819, %v855
        %v860 = vadd.f32 %v844, %v856
        %v861 = vadd.f32 %v845, %v857
        %v862 = vadd.f32 %v846, %v858
        %v863 = vadd.f32 %v847, %v859
        %864 = vrot.lane.b32.xlu0 %v816, 112
        %v865 = vpop.permute.xlu0 %864
        %866 = vrot.lane.b32.xlu0 %v818, 112
        %v867 = vpop.permute.xlu0 %866
        %868 = vrot.lane.b32.xlu0 %v817, 112
        %v869 = vpop.permute.xlu0 %868
        %870 = vrot.lane.b32.xlu0 %v819, 112
        %v871 = vpop.permute.xlu0 %870
        %v872 = vsel %vm722, %v865, %v869
        %v873 = vsel %vm722, %v867, %v871
        %v874 = vsel %vm722, %v869, %v865
        %v875 = vsel %vm722, %v871, %v867
        %v876 = vlaneseq
        %v877 = vshrl.u32 %v876, 7
        %v878 = vsub.s32 0, %v877
        %v879 = vrot.slane %v628, %v878
        %v880 = vlaneseq
        %v881 = vshrl.u32 %v880, 7
        %v882 = vsub.s32 0, %v881
        %v883 = vrot.slane %v629, %v882
        %v884 = vmul.f32 %v872, %v879
        %v885 = vmul.f32 %v874, %v883
        %v886 = vmul.f32 %v873, %v879
        %v887 = vmul.f32 %v875, %v883
        %v888 = vadd.f32 %v860, %v884
        %v889 = vadd.f32 %v861, %v885
        %v890 = vadd.f32 %v862, %v886
        %v891 = vadd.f32 %v863, %v887
        %v892 = vld [vmem:[%s4] sm:$0x3]
        %v894 = vlaneseq
        %v895 = vshrl.u32 %v894, 7
        %v896 = vsub.s32 0, %v895
        %v897 = vrot.slane %v892, %v896
        %v898 = vlaneseq
        %v899 = vshrl.u32 %v898, 7
        %v900 = vsub.s32 1, %v899
        %v901 = vrot.slane %v892, %v900
        %v904 = vadd.f32 %v888, %v897
        %v905 = vadd.f32 %v889, %v901
        %v906 = vadd.f32 %v890, %v897
        %v907 = vadd.f32 %v891, %v901
        %v908 = vsub.f32 0.0, %v904
        %v909 = vsub.f32 0.0, %v905
        %v910 = vsub.f32 0.0, %v906
        %v911 = vsub.f32 0.0, %v907
        %v912 = vmul.f32 %v908, 1.442695
        %v913 = vpow.pop %v912
        %v914 = vmul.f32 %v909, 1.442695
        %v915 = vpow.pop %v914
        %v916 = vmul.f32 %v910, 1.442695
        %v917 = vpow.pop %v916
        %v918 = vmul.f32 %v911, 1.442695
        %v919 = vpow.pop %v918
        %v920 = vadd.f32 %v913, 1.0
        %v921 = vadd.f32 %v915, 1.0
        %v922 = vadd.f32 %v917, 1.0
        %v923 = vadd.f32 %v919, 1.0
        %v924 = vrcp.pop %v920
        %v925 = vrcp.pop %v921
        %v926 = vrcp.pop %v922
        %v927 = vrcp.pop %v923
        %v928 = vmul.f32 %v904, %v924
        %v929 = vmul.f32 %v905, %v925
        %v930 = vmul.f32 %v906, %v926
        %v931 = vmul.f32 %v907, %v927
        %v932 = vadd.f32 %v928, %v930
        %v933 = vrot.slane %v932, 4
        %v934 = vadd.f32 %v932, %v933
        %v935 = vrot.slane %v934, 2
        %v936 = vadd.f32 %v934, %v935
        %v937 = vrot.slane %v936, 1
        %v938 = vadd.f32 %v936, %v937
        %v939 = vadd.f32 %v929, %v931
        %v940 = vrot.slane %v939, 4
        %v941 = vadd.f32 %v939, %v940
        %v942 = vrot.slane %v941, 2
        %v943 = vadd.f32 %v941, %v942
        %v944 = vrot.slane %v943, 1
        %v945 = vadd.f32 %v943, %v944
        %v946 = vadd.f32 %v938, %v945
        %947 = vrot.lane.b32.xlu0 %v946, 64
        %v948 = vpop.permute.xlu0 %947
        %v949 = vadd.f32 %v946, %v948
        %950 = vrot.lane.b32.xlu0 %v949, 96
        %v951 = vpop.permute.xlu0 %950
        %v952 = vadd.f32 %v949, %v951
        %953 = vrot.lane.b32.xlu0 %v952, 112
        %v954 = vpop.permute.xlu0 %953
        %v955 = vadd.f32 %v952, %v954
        %v956 = vmul.f32 %v955, 0.00390625
        %v957 = vld [vmem:[%s6] sm:$0x3]
        %v958 = vld [vmem:[%s7] sm:$0x1]
        %v959 = vld [vmem:[%s8] sm:$0xf]
        %v960 = vmul.f32 %v956, %v957
        %vm961 = vcmask 122880
        %v962 = vsel %vm961, %v960, 0.0
        %963 = vadd.xlane.f32.xlu0 %v962
        %v964 = vpop.xlane.xlu0 %963
        %v965 = vadd.f32 %v964, %v958
        %v966 = vsub.f32 0.0, %v965
        %v967 = vmul.f32 %v966, 1.442695
        %v968 = vpow.pop %v967
        %v969 = vadd.f32 %v968, 1.0
        %v970 = vrcp.pop %v969
        %v971 = vmul.f32 %v965, %v970
        %973 = vset.pattern.permute.xlu0 0
        %974 = vperm.xlu0 %973, %v971
        %v975 = vpop.permute.xlu0 %974
        %v978 = vlaneseq
        %v979 = vshrl.u32 %v978, 7
        %v980 = vsub.s32 0, %v979
        %v981 = vrot.slane %v959, %v980
        %v982 = vlaneseq
        %v983 = vshrl.u32 %v982, 7
        %v984 = vsub.s32 2, %v983
        %v985 = vrot.slane %v959, %v984
        %v988 = vmul.f32 %v975, %v981
        %v989 = vmul.f32 %v975, %v985
        %v990 = vadd.f32 %v988, 0.0
        %v991 = vadd.f32 %v989, 0.0
        %v993 = vrot.slane %v957, 1
        %v995 = vmul.f32 %v956, %v993
        %v996 = vsel %vm961, %v995, 0.0
        %997 = vadd.xlane.f32.xlu0 %v996
        %v998 = vpop.xlane.xlu0 %997
        %v1000 = vlaneseq
        %v1001 = vshrl.u32 %v1000, 7
        %v1002 = vsub.s32 0, %v1001
        %v1003 = vrot.slane %v958, %v1002
        %1004 = vrot.lane.b32.xlu0 %v1003, 127
        %v1005 = vpop.permute.xlu0 %1004
        %v1007 = vadd.f32 %v998, %v1005
        %v1008 = vsub.f32 0.0, %v1007
        %v1009 = vmul.f32 %v1008, 1.442695
        %v1010 = vpow.pop %v1009
        %v1011 = vadd.f32 %v1010, 1.0
        %v1012 = vrcp.pop %v1011
        %v1013 = vmul.f32 %v1007, %v1012
        %1015 = vset.pattern.permute.xlu0 0
        %1016 = vperm.xlu0 %1015, %v1013
        %v1017 = vpop.permute.xlu0 %1016
        %v1019 = vlaneseq
        %v1020 = vshrl.u32 %v1019, 7
        %v1021 = vsub.s32 1, %v1020
        %v1022 = vrot.slane %v959, %v1021
        %v1023 = vlaneseq
        %v1024 = vshrl.u32 %v1023, 7
        %v1025 = vsub.s32 3, %v1024
        %v1026 = vrot.slane %v959, %v1025
        %v1029 = vmul.f32 %v1017, %v1022
        %v1030 = vmul.f32 %v1017, %v1026
        %v1031 = vadd.f32 %v990, %v1029
        %v1032 = vadd.f32 %v991, %v1030
        %v1033 = vld [vmem:[%s9] sm:$0x3]
        %v1035 = vlaneseq
        %v1036 = vshrl.u32 %v1035, 7
        %v1037 = vsub.s32 0, %v1036
        %v1038 = vrot.slane %v1033, %v1037
        %v1039 = vlaneseq
        %v1040 = vshrl.u32 %v1039, 7
        %v1041 = vsub.s32 1, %v1040
        %v1042 = vrot.slane %v1033, %v1041
        %v1045 = vadd.f32 %v1031, %v1038
        %v1046 = vadd.f32 %v1032, %v1042
        %v1047 = vsub.f32 0.0, %v1045
        %v1048 = vsub.f32 0.0, %v1046
        %v1049 = vmul.f32 %v1047, 1.442695
        %v1050 = vpow.pop %v1049
        %v1051 = vmul.f32 %v1048, 1.442695
        %v1052 = vpow.pop %v1051
        %v1053 = vadd.f32 %v1050, 1.0
        %v1054 = vadd.f32 %v1052, 1.0
        %v1055 = vrcp.pop %v1053
        %v1056 = vrcp.pop %v1054
        %v1057 = vlaneseq
        %v1058 = vshrl.u32 %v1057, 7
        %v1059 = vsub.s32 0, %v1058
        %v1060 = vrot.slane %v1055, %v1059
        %v1061 = vlaneseq
        %v1062 = vshrl.u32 %v1061, 7
        %v1063 = vsub.s32 0, %v1062
        %v1064 = vrot.slane %v1056, %v1063
        %v1065 = vmul.f32 %v928, %v1060
        %v1066 = vmul.f32 %v929, %v1064
        %v1067 = vmul.f32 %v930, %v1060
        %v1068 = vmul.f32 %v931, %v1064
        %v1069 = vpack.c.bf16 %v1067, %v1065
        %v1070 = vpack.c.bf16 %v1068, %v1066
        %v1071 = vld [vmem:[#allocation5] sm:$0xf]
        %v1072 = vld [vmem:[#allocation5 + $0x4] sm:$0xf]
        %v1073 = vld [vmem:[#allocation5 + $0x8] sm:$0xf]
        %v1074 = vld [vmem:[#allocation5 + $0xc] sm:$0xf]
        %v1075 = vld [vmem:[#allocation5 + $0x10] sm:$0xf]
        %v1076 = vld [vmem:[#allocation5 + $0x14] sm:$0xf]
        %v1077 = vld [vmem:[#allocation5 + $0x18] sm:$0xf]
        %v1078 = vld [vmem:[#allocation5 + $0x1c] sm:$0xf]
        %v1079 = vld [vmem:[#allocation5 + $0x20] sm:$0xf]
        %v1080 = vld [vmem:[#allocation5 + $0x24] sm:$0xf]
        %v1081 = vld [vmem:[#allocation5 + $0x28] sm:$0xf]
        %v1082 = vld [vmem:[#allocation5 + $0x2c] sm:$0xf]
        %v1083 = vld [vmem:[#allocation5 + $0x30] sm:$0xf]
        %v1084 = vld [vmem:[#allocation5 + $0x34] sm:$0xf]
        %v1085 = vld [vmem:[#allocation5 + $0x38] sm:$0xf]
        %v1086 = vld [vmem:[#allocation5 + $0x3c] sm:$0xf]
        %v1087 = vld [vmem:[#allocation5 + $0x40] sm:$0xf]
        %v1088 = vld [vmem:[#allocation5 + $0x44] sm:$0xf]
        %v1089 = vld [vmem:[#allocation5 + $0x48] sm:$0xf]
        %v1090 = vld [vmem:[#allocation5 + $0x4c] sm:$0xf]
        %v1091 = vld [vmem:[#allocation5 + $0x50] sm:$0xf]
        %v1092 = vld [vmem:[#allocation5 + $0x54] sm:$0xf]
        %v1093 = vld [vmem:[#allocation5 + $0x58] sm:$0xf]
        %v1094 = vld [vmem:[#allocation5 + $0x5c] sm:$0xf]
        %v1095 = vld [vmem:[#allocation5 + $0x60] sm:$0xf]
        %v1096 = vld [vmem:[#allocation5 + $0x64] sm:$0xf]
        %v1097 = vld [vmem:[#allocation5 + $0x68] sm:$0xf]
        %v1098 = vld [vmem:[#allocation5 + $0x6c] sm:$0xf]
        %v1099 = vld [vmem:[#allocation5 + $0x70] sm:$0xf]
        %v1100 = vld [vmem:[#allocation5 + $0x74] sm:$0xf]
        %v1101 = vld [vmem:[#allocation5 + $0x78] sm:$0xf]
        %v1102 = vld [vmem:[#allocation5 + $0x7c] sm:$0xf]
        %v1103 = vld [vmem:[%s11] sm:$0x1]
        %v1105 = vlaneseq
        %v1106 = vshrl.u32 %v1105, 7
        %v1107 = vsub.s32 0, %v1106
        %v1108 = vrot.slane %v1103, %v1107
        %v1142 = vunpack.c.l.b16 %v1071
        %v1143 = vunpack.c.l.b16 %v1072
        %v1144 = vunpack.c.l.b16 %v1073
        %v1145 = vunpack.c.l.b16 %v1074
        %v1146 = vunpack.c.l.b16 %v1075
        %v1147 = vunpack.c.l.b16 %v1076
        %v1148 = vunpack.c.l.b16 %v1077
        %v1149 = vunpack.c.l.b16 %v1078
        %v1150 = vunpack.c.l.b16 %v1079
        %v1151 = vunpack.c.l.b16 %v1080
        %v1152 = vunpack.c.l.b16 %v1081
        %v1153 = vunpack.c.l.b16 %v1082
        %v1154 = vunpack.c.l.b16 %v1083
        %v1155 = vunpack.c.l.b16 %v1084
        %v1156 = vunpack.c.l.b16 %v1085
        %v1157 = vunpack.c.l.b16 %v1086
        %v1158 = vunpack.c.l.b16 %v1087
        %v1159 = vunpack.c.l.b16 %v1088
        %v1160 = vunpack.c.l.b16 %v1089
        %v1161 = vunpack.c.l.b16 %v1090
        %v1162 = vunpack.c.l.b16 %v1091
        %v1163 = vunpack.c.l.b16 %v1092
        %v1164 = vunpack.c.l.b16 %v1093
        %v1165 = vunpack.c.l.b16 %v1094
        %v1166 = vunpack.c.l.b16 %v1095
        %v1167 = vunpack.c.l.b16 %v1096
        %v1168 = vunpack.c.l.b16 %v1097
        %v1169 = vunpack.c.l.b16 %v1098
        %v1170 = vunpack.c.l.b16 %v1099
        %v1171 = vunpack.c.l.b16 %v1100
        %v1172 = vunpack.c.l.b16 %v1101
        %v1173 = vunpack.c.l.b16 %v1102
        %v1174 = vpack.c.b16 %v1143, %v1142
        %v1175 = vpack.c.b16 %v1145, %v1144
        %v1176 = vpack.c.b16 %v1147, %v1146
        %v1177 = vpack.c.b16 %v1149, %v1148
        %v1178 = vpack.c.b16 %v1151, %v1150
        %v1179 = vpack.c.b16 %v1153, %v1152
        %v1180 = vpack.c.b16 %v1155, %v1154
        %v1181 = vpack.c.b16 %v1157, %v1156
        %v1182 = vpack.c.b16 %v1159, %v1158
        %v1183 = vpack.c.b16 %v1161, %v1160
        %v1184 = vpack.c.b16 %v1163, %v1162
        %v1185 = vpack.c.b16 %v1165, %v1164
        %v1186 = vpack.c.b16 %v1167, %v1166
        %v1187 = vpack.c.b16 %v1169, %v1168
        %v1188 = vpack.c.b16 %v1171, %v1170
        %v1189 = vpack.c.b16 %v1173, %v1172
        %1206 = vmatprep.subr.bf16.mxu0 0
        %1207 = vmatpush1.bf16.msra.mxu0 %v1174
        %1208 = vmatprep.subr.bf16.mxu0 0
        %1209 = vmatpush1.bf16.msra.mxu0 %v1175
        %1210 = vmatprep.subr.bf16.mxu0 0
        %1211 = vmatpush1.bf16.msra.mxu0 %v1176
        %1212 = vmatprep.subr.bf16.mxu0 0
        %1213 = vmatpush1.bf16.msra.mxu0 %v1177
        %1214 = vmatprep.subr.bf16.mxu0 0
        %1215 = vmatpush1.bf16.msra.mxu0 %v1178
        %1216 = vmatprep.subr.bf16.mxu0 0
        %1217 = vmatpush1.bf16.msra.mxu0 %v1179
        %1218 = vmatprep.subr.bf16.mxu0 0
        %1219 = vmatpush1.bf16.msra.mxu0 %v1180
        %1220 = vmatprep.subr.bf16.mxu0 0
        %1221 = vmatpush1.bf16.msra.mxu0 %v1181
        %1222 = vmatprep.subr.bf16.mxu0 0
        %1223 = vmatpush1.bf16.msra.mxu0 %v1182
        %1224 = vmatprep.subr.bf16.mxu0 0
        %1225 = vmatpush1.bf16.msra.mxu0 %v1183
        %1226 = vmatprep.subr.bf16.mxu0 0
        %1227 = vmatpush1.bf16.msra.mxu0 %v1184
        %1228 = vmatprep.subr.bf16.mxu0 0
        %1229 = vmatpush1.bf16.msra.mxu0 %v1185
        %1230 = vmatprep.subr.bf16.mxu0 0
        %1231 = vmatpush1.bf16.msra.mxu0 %v1186
        %1232 = vmatprep.subr.bf16.mxu0 0
        %1233 = vmatpush1.bf16.msra.mxu0 %v1187
        %1234 = vmatprep.subr.bf16.mxu0 0
        %1235 = vmatpush1.bf16.msra.mxu0 %v1188
        %1236 = vmatprep.subr.bf16.mxu0 0
        %1237 = vmatpush1.bf16.msra.mxu0 %v1189
        %1238 = vmatprep.mubr.bf16.mxu0 %v1070
        %1239 = vmatmul.mubr.bf16.gmra.mrb[0].mxu0 %v1069
        %v1240 = vpop.f32.mrb[0].mxu0
        %v1241 = vadd.f32 %v1108, %v1240
        %v1242 = vpop.f32.mrb[0].mxu0
        %v1243 = vpop.f32.mrb[0].mxu0
        %v1244 = vadd.f32 %v1108, %v1243
        %v1245 = vpop.f32.mrb[0].mxu0
        %1246 = vdwg.mxu0
        %v1247 = vsub.f32 0.0, %v1241
        %v1248 = vsub.f32 0.0, %v1244
        %v1249 = vmul.f32 %v1247, 1.442695
        %v1250 = vpow.pop %v1249
        %v1251 = vmul.f32 %v1248, 1.442695
        %v1252 = vpow.pop %v1251
        %v1253 = vadd.f32 %v1250, 1.0
        %v1254 = vadd.f32 %v1252, 1.0
        %v1255 = vrcp.pop %v1253
        %v1256 = vrcp.pop %v1254
        %v1257 = vmul.f32 %v1241, %v1255
        %v1258 = vmul.f32 %v1244, %v1256
        %v1259 = vadd.f32 %v1257, %v448
        %v1260 = vadd.f32 %v1258, %v449
        %v1261 = vpack.c.bf16 %v1260, %v1259
        %s1262 = scalar_lea.vmem [#allocation2], 128
        %v1263 = vld [vmem:[%s1262] sm:$0xff]
        %v1264 = vld [vmem:[%s1262 + $0x8] sm:$0xff]
        %v1265 = vld [vmem:[%s1262 + $0x10] sm:$0xff]
        %v1266 = vld [vmem:[%s1262 + $0x18] sm:$0xff]
        %v1267 = vld [vmem:[%s1262 + $0x20] sm:$0xff]
        %v1268 = vld [vmem:[%s1262 + $0x28] sm:$0xff]
        %v1269 = vld [vmem:[%s1262 + $0x30] sm:$0xff]
        %v1270 = vld [vmem:[%s1262 + $0x38] sm:$0xff]
        %v1271 = vld [vmem:[%s1262 + $0x40] sm:$0xff]
        %v1272 = vld [vmem:[%s1262 + $0x48] sm:$0xff]
        %v1273 = vld [vmem:[%s1262 + $0x50] sm:$0xff]
        %v1274 = vld [vmem:[%s1262 + $0x58] sm:$0xff]
        %v1275 = vld [vmem:[%s1262 + $0x60] sm:$0xff]
        %v1276 = vld [vmem:[%s1262 + $0x68] sm:$0xff]
        %v1277 = vld [vmem:[%s1262 + $0x70] sm:$0xff]
        %v1278 = vld [vmem:[%s1262 + $0x78] sm:$0xff]
        %s1279 = scalar_lea.vmem %s2, 2
        %v1280 = vld [vmem:[%s1279] sm:$0x3]
        %v1282 = vlaneseq
        %v1283 = vshrl.u32 %v1282, 7
        %v1284 = vsub.s32 0, %v1283
        %v1285 = vrot.slane %v1280, %v1284
        %v1286 = vlaneseq
        %v1287 = vshrl.u32 %v1286, 7
        %v1288 = vsub.s32 1, %v1287
        %v1289 = vrot.slane %v1280, %v1288
        %v1308 = vunpack.c.l.b16 %v1263
        %v1309 = vunpack.c.h.b16 %v1263
        %v1310 = vunpack.c.l.b16 %v1264
        %v1311 = vunpack.c.h.b16 %v1264
        %v1312 = vunpack.c.l.b16 %v1265
        %v1313 = vunpack.c.h.b16 %v1265
        %v1314 = vunpack.c.l.b16 %v1266
        %v1315 = vunpack.c.h.b16 %v1266
        %v1316 = vunpack.c.l.b16 %v1267
        %v1317 = vunpack.c.h.b16 %v1267
        %v1318 = vunpack.c.l.b16 %v1268
        %v1319 = vunpack.c.h.b16 %v1268
        %v1320 = vunpack.c.l.b16 %v1269
        %v1321 = vunpack.c.h.b16 %v1269
        %v1322 = vunpack.c.l.b16 %v1270
        %v1323 = vunpack.c.h.b16 %v1270
        %v1324 = vunpack.c.l.b16 %v1271
        %v1325 = vunpack.c.h.b16 %v1271
        %v1326 = vunpack.c.l.b16 %v1272
        %v1327 = vunpack.c.h.b16 %v1272
        %v1328 = vunpack.c.l.b16 %v1273
        %v1329 = vunpack.c.h.b16 %v1273
        %v1330 = vunpack.c.l.b16 %v1274
        %v1331 = vunpack.c.h.b16 %v1274
        %v1332 = vunpack.c.l.b16 %v1275
        %v1333 = vunpack.c.h.b16 %v1275
        %v1334 = vunpack.c.l.b16 %v1276
        %v1335 = vunpack.c.h.b16 %v1276
        %v1336 = vunpack.c.l.b16 %v1277
        %v1337 = vunpack.c.h.b16 %v1277
        %v1338 = vunpack.c.l.b16 %v1278
        %v1339 = vunpack.c.h.b16 %v1278
        %v1340 = vpack.c.b16 %v1310, %v1308
        %v1341 = vpack.c.b16 %v1311, %v1309
        %v1342 = vpack.c.b16 %v1314, %v1312
        %v1343 = vpack.c.b16 %v1315, %v1313
        %v1344 = vpack.c.b16 %v1318, %v1316
        %v1345 = vpack.c.b16 %v1319, %v1317
        %v1346 = vpack.c.b16 %v1322, %v1320
        %v1347 = vpack.c.b16 %v1323, %v1321
        %v1348 = vpack.c.b16 %v1326, %v1324
        %v1349 = vpack.c.b16 %v1327, %v1325
        %v1350 = vpack.c.b16 %v1330, %v1328
        %v1351 = vpack.c.b16 %v1331, %v1329
        %v1352 = vpack.c.b16 %v1334, %v1332
        %v1353 = vpack.c.b16 %v1335, %v1333
        %v1354 = vpack.c.b16 %v1338, %v1336
        %v1355 = vpack.c.b16 %v1339, %v1337
        %1372 = vmatprep.subr.bf16.mxu0 %v1341
        %1373 = vmatpush1.bf16.msra.mxu0 %v1340
        %1374 = vmatprep.subr.bf16.mxu0 %v1343
        %1375 = vmatpush1.bf16.msra.mxu0 %v1342
        %1376 = vmatprep.subr.bf16.mxu0 %v1345
        %1377 = vmatpush1.bf16.msra.mxu0 %v1344
        %1378 = vmatprep.subr.bf16.mxu0 %v1347
        %1379 = vmatpush1.bf16.msra.mxu0 %v1346
        %1380 = vmatprep.subr.bf16.mxu0 %v1349
        %1381 = vmatpush1.bf16.msra.mxu0 %v1348
        %1382 = vmatprep.subr.bf16.mxu0 %v1351
        %1383 = vmatpush1.bf16.msra.mxu0 %v1350
        %1384 = vmatprep.subr.bf16.mxu0 %v1353
        %1385 = vmatpush1.bf16.msra.mxu0 %v1352
        %1386 = vmatprep.subr.bf16.mxu0 %v1355
        %1387 = vmatpush1.bf16.msra.mxu0 %v1354
        %1388 = vmatprep.subr.bf16.mxu0 0
        %1389 = vmatpush1.bf16.msra.mxu0 0
        %1390 = vmatprep.subr.bf16.mxu0 0
        %1391 = vmatpush1.bf16.msra.mxu0 0
        %1392 = vmatprep.subr.bf16.mxu0 0
        %1393 = vmatpush1.bf16.msra.mxu0 0
        %1394 = vmatprep.subr.bf16.mxu0 0
        %1395 = vmatpush1.bf16.msra.mxu0 0
        %1396 = vmatprep.subr.bf16.mxu0 0
        %1397 = vmatpush1.bf16.msra.mxu0 0
        %1398 = vmatprep.subr.bf16.mxu0 0
        %1399 = vmatpush1.bf16.msra.mxu0 0
        %1400 = vmatprep.subr.bf16.mxu0 0
        %1401 = vmatpush1.bf16.msra.mxu0 0
        %1402 = vmatprep.subr.bf16.mxu0 0
        %1403 = vmatpush1.bf16.msra.mxu0 0
        %1404 = vmatprep.mubr.bf16.mxu0 0
        %1405 = vmatmul.mubr.bf16.gmra.mrb[0].mxu0 %v1261
        %v1406 = vpop.f32.mrb[0].mxu0
        %v1407 = vadd.f32 %v1285, %v1406
        %v1408 = vpop.f32.mrb[0].mxu0
        %v1409 = vadd.f32 %v1289, %v1408
        %v1410 = vpop.f32.mrb[0].mxu0
        %v1411 = vadd.f32 %v1285, %v1410
        %v1412 = vpop.f32.mrb[0].mxu0
        %v1413 = vadd.f32 %v1289, %v1412
        %1414 = vdwg.mxu0
        %v1415 = vsub.f32 0.0, %v1407
        %v1416 = vsub.f32 0.0, %v1409
        %v1417 = vsub.f32 0.0, %v1411
        %v1418 = vsub.f32 0.0, %v1413
        %v1419 = vmul.f32 %v1415, 1.442695
        %v1420 = vpow.pop %v1419
        %v1421 = vmul.f32 %v1416, 1.442695
        %v1422 = vpow.pop %v1421
        %v1423 = vmul.f32 %v1417, 1.442695
        %v1424 = vpow.pop %v1423
        %v1425 = vmul.f32 %v1418, 1.442695
        %v1426 = vpow.pop %v1425
        %v1427 = vadd.f32 %v1420, 1.0
        %v1428 = vadd.f32 %v1422, 1.0
        %v1429 = vadd.f32 %v1424, 1.0
        %v1430 = vadd.f32 %v1426, 1.0
        %v1431 = vrcp.pop %v1427
        %v1432 = vrcp.pop %v1428
        %v1433 = vrcp.pop %v1429
        %v1434 = vrcp.pop %v1430
        %v1435 = vmul.f32 %v1407, %v1431
        %v1436 = vmul.f32 %v1409, %v1432
        %v1437 = vmul.f32 %v1411, %v1433
        %v1438 = vmul.f32 %v1413, %v1434
        %s1439 = scalar_lea.vmem %s3, 32
        %v1440 = vld [vmem:[%s1439] sm:$0xff]
        %v1441 = vld [vmem:[%s1439 + $0x8] sm:$0xff]
        %v1442 = vld [vmem:[%s1439 + $0x10] sm:$0x1]
        %v1443 = vld [vmem:[%s1439 + $0x18] sm:$0x1]
        %v1444 = vlaneseq
        %v1445 = vshrl.u32 %v1444, 7
        %v1446 = vsub.s32 4, %v1445
        %v1447 = vrot.slane %v1440, %v1446
        %v1448 = vlaneseq
        %v1449 = vshrl.u32 %v1448, 7
        %v1450 = vsub.s32 4, %v1449
        %v1451 = vrot.slane %v1441, %v1450
        %v1452 = vmul.f32 %v1435, %v1447
        %v1453 = vmul.f32 %v1436, %v1451
        %v1454 = vmul.f32 %v1437, %v1447
        %v1455 = vmul.f32 %v1438, %v1451
        %v1456 = vrot.slane %v1435, 7
        %v1457 = vrot.slane %v1436, 7
        %v1458 = vrot.slane %v1437, 7
        %v1459 = vrot.slane %v1438, 7
        %v1460 = vsel %vm648, %v1456, %v1458
        %v1461 = vsel %vm648, %v1457, %v1459
        %v1462 = vsel %vm648, %v1458, %v1456
        %v1463 = vsel %vm648, %v1459, %v1457
        %v1464 = vmul.f32 %v1462, %v656
        %v1465 = vmul.f32 %v1463, %v656
        %v1466 = vmul.f32 %v1460, %v661
        %v1467 = vmul.f32 %v1461, %v661
        %1468 = vrot.lane.b32.xlu0 %v1464, 16
        %v1469 = vpop.permute.xlu0 %1468
        %1470 = vrot.lane.b32.xlu0 %v1466, 16
        %v1471 = vpop.permute.xlu0 %1470
        %1472 = vrot.lane.b32.xlu0 %v1465, 16
        %v1473 = vpop.permute.xlu0 %1472
        %1474 = vrot.lane.b32.xlu0 %v1467, 16
        %v1475 = vpop.permute.xlu0 %1474
        %v1476 = vsel %vm677, %v1469, %v1473
        %v1477 = vsel %vm677, %v1471, %v1475
        %v1478 = vsel %vm677, %v1473, %v1469
        %v1479 = vsel %vm677, %v1475, %v1471
        %v1480 = vlaneseq
        %v1481 = vshrl.u32 %v1480, 7
        %v1482 = vsub.s32 0, %v1481
        %v1483 = vrot.slane %v1440, %v1482
        %v1484 = vlaneseq
        %v1485 = vshrl.u32 %v1484, 7
        %v1486 = vsub.s32 0, %v1485
        %v1487 = vrot.slane %v1441, %v1486
        %v1488 = vmul.f32 %v1478, %v1483
        %v1489 = vmul.f32 %v1476, %v1487
        %v1490 = vmul.f32 %v1479, %v1483
        %v1491 = vmul.f32 %v1477, %v1487
        %v1492 = vadd.f32 %v1452, %v1488
        %v1493 = vadd.f32 %v1453, %v1489
        %v1494 = vadd.f32 %v1454, %v1490
        %v1495 = vadd.f32 %v1455, %v1491
        %v1496 = vlaneseq
        %v1497 = vshrl.u32 %v1496, 7
        %v1498 = vsub.s32 1, %v1497
        %v1499 = vrot.slane %v1440, %v1498
        %v1500 = vlaneseq
        %v1501 = vshrl.u32 %v1500, 7
        %v1502 = vsub.s32 1, %v1501
        %v1503 = vrot.slane %v1441, %v1502
        %v1504 = vmul.f32 %v1464, %v1499
        %v1505 = vmul.f32 %v1465, %v1503
        %v1506 = vmul.f32 %v1466, %v1499
        %v1507 = vmul.f32 %v1467, %v1503
        %v1508 = vadd.f32 %v1492, %v1504
        %v1509 = vadd.f32 %v1493, %v1505
        %v1510 = vadd.f32 %v1494, %v1506
        %v1511 = vadd.f32 %v1495, %v1507
        %1512 = vrot.lane.b32.xlu0 %v1464, 112
        %v1513 = vpop.permute.xlu0 %1512
        %1514 = vrot.lane.b32.xlu0 %v1466, 112
        %v1515 = vpop.permute.xlu0 %1514
        %1516 = vrot.lane.b32.xlu0 %v1465, 112
        %v1517 = vpop.permute.xlu0 %1516
        %1518 = vrot.lane.b32.xlu0 %v1467, 112
        %v1519 = vpop.permute.xlu0 %1518
        %v1520 = vsel %vm722, %v1513, %v1517
        %v1521 = vsel %vm722, %v1515, %v1519
        %v1522 = vsel %vm722, %v1517, %v1513
        %v1523 = vsel %vm722, %v1519, %v1515
        %v1524 = vlaneseq
        %v1525 = vshrl.u32 %v1524, 7
        %v1526 = vsub.s32 2, %v1525
        %v1527 = vrot.slane %v1440, %v1526
        %v1528 = vlaneseq
        %v1529 = vshrl.u32 %v1528, 7
        %v1530 = vsub.s32 2, %v1529
        %v1531 = vrot.slane %v1441, %v1530
        %v1532 = vmul.f32 %v1520, %v1527
        %v1533 = vmul.f32 %v1522, %v1531
        %v1534 = vmul.f32 %v1521, %v1527
        %v1535 = vmul.f32 %v1523, %v1531
        %v1536 = vadd.f32 %v1508, %v1532
        %v1537 = vadd.f32 %v1509, %v1533
        %v1538 = vadd.f32 %v1510, %v1534
        %v1539 = vadd.f32 %v1511, %v1535
        %1540 = vrot.lane.b32.xlu0 %v1435, 16
        %v1541 = vpop.permute.xlu0 %1540
        %1542 = vrot.lane.b32.xlu0 %v1437, 16
        %v1543 = vpop.permute.xlu0 %1542
        %1544 = vrot.lane.b32.xlu0 %v1436, 16
        %v1545 = vpop.permute.xlu0 %1544
        %1546 = vrot.lane.b32.xlu0 %v1438, 16
        %v1547 = vpop.permute.xlu0 %1546
        %v1548 = vsel %vm677, %v1541, %v1545
        %v1549 = vsel %vm677, %v1543, %v1547
        %v1550 = vsel %vm677, %v1545, %v1541
        %v1551 = vsel %vm677, %v1547, %v1543
        %v1552 = vlaneseq
        %v1553 = vshrl.u32 %v1552, 7
        %v1554 = vsub.s32 3, %v1553
        %v1555 = vrot.slane %v1440, %v1554
        %v1556 = vlaneseq
        %v1557 = vshrl.u32 %v1556, 7
        %v1558 = vsub.s32 3, %v1557
        %v1559 = vrot.slane %v1441, %v1558
        %v1560 = vmul.f32 %v1550, %v1555
        %v1561 = vmul.f32 %v1548, %v1559
        %v1562 = vmul.f32 %v1551, %v1555
        %v1563 = vmul.f32 %v1549, %v1559
        %v1564 = vadd.f32 %v1536, %v1560
        %v1565 = vadd.f32 %v1537, %v1561
        %v1566 = vadd.f32 %v1538, %v1562
        %v1567 = vadd.f32 %v1539, %v1563
        %1568 = vrot.lane.b32.xlu0 %v1435, 112
        %v1569 = vpop.permute.xlu0 %1568
        %1570 = vrot.lane.b32.xlu0 %v1437, 112
        %v1571 = vpop.permute.xlu0 %1570
        %1572 = vrot.lane.b32.xlu0 %v1436, 112
        %v1573 = vpop.permute.xlu0 %1572
        %1574 = vrot.lane.b32.xlu0 %v1438, 112
        %v1575 = vpop.permute.xlu0 %1574
        %v1576 = vsel %vm722, %v1569, %v1573
        %v1577 = vsel %vm722, %v1571, %v1575
        %v1578 = vsel %vm722, %v1573, %v1569
        %v1579 = vsel %vm722, %v1575, %v1571
        %v1580 = vlaneseq
        %v1581 = vshrl.u32 %v1580, 7
        %v1582 = vsub.s32 5, %v1581
        %v1583 = vrot.slane %v1440, %v1582
        %v1584 = vlaneseq
        %v1585 = vshrl.u32 %v1584, 7
        %v1586 = vsub.s32 5, %v1585
        %v1587 = vrot.slane %v1441, %v1586
        %v1588 = vmul.f32 %v1576, %v1583
        %v1589 = vmul.f32 %v1578, %v1587
        %v1590 = vmul.f32 %v1577, %v1583
        %v1591 = vmul.f32 %v1579, %v1587
        %v1592 = vadd.f32 %v1564, %v1588
        %v1593 = vadd.f32 %v1565, %v1589
        %v1594 = vadd.f32 %v1566, %v1590
        %v1595 = vadd.f32 %v1567, %v1591
        %v1596 = vrot.slane %v1435, 1
        %v1597 = vrot.slane %v1436, 1
        %v1598 = vrot.slane %v1437, 1
        %v1599 = vrot.slane %v1438, 1
        %v1600 = vsel %vm803, %v1596, %v1598
        %v1601 = vsel %vm803, %v1597, %v1599
        %v1602 = vsel %vm803, %v1598, %v1596
        %v1603 = vsel %vm803, %v1599, %v1597
        %v1604 = vmul.f32 %v1600, %v810
        %v1605 = vmul.f32 %v1601, %v810
        %v1606 = vmul.f32 %v1602, %v814
        %v1607 = vmul.f32 %v1603, %v814
        %1608 = vrot.lane.b32.xlu0 %v1604, 16
        %v1609 = vpop.permute.xlu0 %1608
        %1610 = vrot.lane.b32.xlu0 %v1606, 16
        %v1611 = vpop.permute.xlu0 %1610
        %1612 = vrot.lane.b32.xlu0 %v1605, 16
        %v1613 = vpop.permute.xlu0 %1612
        %1614 = vrot.lane.b32.xlu0 %v1607, 16
        %v1615 = vpop.permute.xlu0 %1614
        %v1616 = vsel %vm677, %v1609, %v1613
        %v1617 = vsel %vm677, %v1611, %v1615
        %v1618 = vsel %vm677, %v1613, %v1609
        %v1619 = vsel %vm677, %v1615, %v1611
        %v1620 = vlaneseq
        %v1621 = vshrl.u32 %v1620, 7
        %v1622 = vsub.s32 6, %v1621
        %v1623 = vrot.slane %v1440, %v1622
        %v1624 = vlaneseq
        %v1625 = vshrl.u32 %v1624, 7
        %v1626 = vsub.s32 6, %v1625
        %v1627 = vrot.slane %v1441, %v1626
        %v1628 = vmul.f32 %v1618, %v1623
        %v1629 = vmul.f32 %v1616, %v1627
        %v1630 = vmul.f32 %v1619, %v1623
        %v1631 = vmul.f32 %v1617, %v1627
        %v1632 = vadd.f32 %v1592, %v1628
        %v1633 = vadd.f32 %v1593, %v1629
        %v1634 = vadd.f32 %v1594, %v1630
        %v1635 = vadd.f32 %v1595, %v1631
        %v1636 = vlaneseq
        %v1637 = vshrl.u32 %v1636, 7
        %v1638 = vsub.s32 7, %v1637
        %v1639 = vrot.slane %v1440, %v1638
        %v1640 = vlaneseq
        %v1641 = vshrl.u32 %v1640, 7
        %v1642 = vsub.s32 7, %v1641
        %v1643 = vrot.slane %v1441, %v1642
        %v1644 = vmul.f32 %v1604, %v1639
        %v1645 = vmul.f32 %v1605, %v1643
        %v1646 = vmul.f32 %v1606, %v1639
        %v1647 = vmul.f32 %v1607, %v1643
        %v1648 = vadd.f32 %v1632, %v1644
        %v1649 = vadd.f32 %v1633, %v1645
        %v1650 = vadd.f32 %v1634, %v1646
        %v1651 = vadd.f32 %v1635, %v1647
        %1652 = vrot.lane.b32.xlu0 %v1604, 112
        %v1653 = vpop.permute.xlu0 %1652
        %1654 = vrot.lane.b32.xlu0 %v1606, 112
        %v1655 = vpop.permute.xlu0 %1654
        %1656 = vrot.lane.b32.xlu0 %v1605, 112
        %v1657 = vpop.permute.xlu0 %1656
        %1658 = vrot.lane.b32.xlu0 %v1607, 112
        %v1659 = vpop.permute.xlu0 %1658
        %v1660 = vsel %vm722, %v1653, %v1657
        %v1661 = vsel %vm722, %v1655, %v1659
        %v1662 = vsel %vm722, %v1657, %v1653
        %v1663 = vsel %vm722, %v1659, %v1655
        %v1664 = vlaneseq
        %v1665 = vshrl.u32 %v1664, 7
        %v1666 = vsub.s32 0, %v1665
        %v1667 = vrot.slane %v1442, %v1666
        %v1668 = vlaneseq
        %v1669 = vshrl.u32 %v1668, 7
        %v1670 = vsub.s32 0, %v1669
        %v1671 = vrot.slane %v1443, %v1670
        %v1672 = vmul.f32 %v1660, %v1667
        %v1673 = vmul.f32 %v1662, %v1671
        %v1674 = vmul.f32 %v1661, %v1667
        %v1675 = vmul.f32 %v1663, %v1671
        %v1676 = vadd.f32 %v1648, %v1672
        %v1677 = vadd.f32 %v1649, %v1673
        %v1678 = vadd.f32 %v1650, %v1674
        %v1679 = vadd.f32 %v1651, %v1675
        %s1680 = scalar_lea.vmem %s4, 2
        %v1681 = vld [vmem:[%s1680] sm:$0x3]
        %v1683 = vlaneseq
        %v1684 = vshrl.u32 %v1683, 7
        %v1685 = vsub.s32 0, %v1684
        %v1686 = vrot.slane %v1681, %v1685
        %v1687 = vlaneseq
        %v1688 = vshrl.u32 %v1687, 7
        %v1689 = vsub.s32 1, %v1688
        %v1690 = vrot.slane %v1681, %v1689
        %v1693 = vadd.f32 %v1676, %v1686
        %v1694 = vadd.f32 %v1677, %v1690
        %v1695 = vadd.f32 %v1678, %v1686
        %v1696 = vadd.f32 %v1679, %v1690
        %v1697 = vsub.f32 0.0, %v1693
        %v1698 = vsub.f32 0.0, %v1694
        %v1699 = vsub.f32 0.0, %v1695
        %v1700 = vsub.f32 0.0, %v1696
        %v1701 = vmul.f32 %v1697, 1.442695
        %v1702 = vpow.pop %v1701
        %v1703 = vmul.f32 %v1698, 1.442695
        %v1704 = vpow.pop %v1703
        %v1705 = vmul.f32 %v1699, 1.442695
        %v1706 = vpow.pop %v1705
        %v1707 = vmul.f32 %v1700, 1.442695
        %v1708 = vpow.pop %v1707
        %v1709 = vadd.f32 %v1702, 1.0
        %v1710 = vadd.f32 %v1704, 1.0
        %v1711 = vadd.f32 %v1706, 1.0
        %v1712 = vadd.f32 %v1708, 1.0
        %v1713 = vrcp.pop %v1709
        %v1714 = vrcp.pop %v1710
        %v1715 = vrcp.pop %v1711
        %v1716 = vrcp.pop %v1712
        %v1717 = vmul.f32 %v1693, %v1713
        %v1718 = vmul.f32 %v1694, %v1714
        %v1719 = vmul.f32 %v1695, %v1715
        %v1720 = vmul.f32 %v1696, %v1716
        %v1721 = vadd.f32 %v1717, %v1719
        %v1722 = vrot.slane %v1721, 4
        %v1723 = vadd.f32 %v1721, %v1722
        %v1724 = vrot.slane %v1723, 2
        %v1725 = vadd.f32 %v1723, %v1724
        %v1726 = vrot.slane %v1725, 1
        %v1727 = vadd.f32 %v1725, %v1726
        %v1728 = vadd.f32 %v1718, %v1720
        %v1729 = vrot.slane %v1728, 4
        %v1730 = vadd.f32 %v1728, %v1729
        %v1731 = vrot.slane %v1730, 2
        %v1732 = vadd.f32 %v1730, %v1731
        %v1733 = vrot.slane %v1732, 1
        %v1734 = vadd.f32 %v1732, %v1733
        %v1735 = vadd.f32 %v1727, %v1734
        %1736 = vrot.lane.b32.xlu0 %v1735, 64
        %v1737 = vpop.permute.xlu0 %1736
        %v1738 = vadd.f32 %v1735, %v1737
        %1739 = vrot.lane.b32.xlu0 %v1738, 96
        %v1740 = vpop.permute.xlu0 %1739
        %v1741 = vadd.f32 %v1738, %v1740
        %1742 = vrot.lane.b32.xlu0 %v1741, 112
        %v1743 = vpop.permute.xlu0 %1742
        %v1744 = vadd.f32 %v1741, %v1743
        %v1745 = vmul.f32 %v1744, 0.00390625
        %s1746 = scalar_lea.vmem %s6, 2
        %v1747 = vld [vmem:[%s1746] sm:$0x3]
        %s1748 = scalar_lea.vmem %s7, 1
        %v1749 = vld [vmem:[%s1748] sm:$0x1]
        %s1750 = scalar_lea.vmem %s8, 4
        %v1751 = vld [vmem:[%s1750] sm:$0xf]
        %v1752 = vmul.f32 %v1745, %v1747
        %v1753 = vsel %vm961, %v1752, 0.0
        %1754 = vadd.xlane.f32.xlu0 %v1753
        %v1755 = vpop.xlane.xlu0 %1754
        %v1756 = vadd.f32 %v1755, %v1749
        %v1757 = vsub.f32 0.0, %v1756
        %v1758 = vmul.f32 %v1757, 1.442695
        %v1759 = vpow.pop %v1758
        %v1760 = vadd.f32 %v1759, 1.0
        %v1761 = vrcp.pop %v1760
        %v1762 = vmul.f32 %v1756, %v1761
        %1764 = vset.pattern.permute.xlu0 0
        %1765 = vperm.xlu0 %1764, %v1762
        %v1766 = vpop.permute.xlu0 %1765
        %v1769 = vlaneseq
        %v1770 = vshrl.u32 %v1769, 7
        %v1771 = vsub.s32 0, %v1770
        %v1772 = vrot.slane %v1751, %v1771
        %v1773 = vlaneseq
        %v1774 = vshrl.u32 %v1773, 7
        %v1775 = vsub.s32 2, %v1774
        %v1776 = vrot.slane %v1751, %v1775
        %v1779 = vmul.f32 %v1766, %v1772
        %v1780 = vmul.f32 %v1766, %v1776
        %v1781 = vadd.f32 %v1779, 0.0
        %v1782 = vadd.f32 %v1780, 0.0
        %v1784 = vrot.slane %v1747, 1
        %v1786 = vmul.f32 %v1745, %v1784
        %v1787 = vsel %vm961, %v1786, 0.0
        %1788 = vadd.xlane.f32.xlu0 %v1787
        %v1789 = vpop.xlane.xlu0 %1788
        %v1791 = vlaneseq
        %v1792 = vshrl.u32 %v1791, 7
        %v1793 = vsub.s32 0, %v1792
        %v1794 = vrot.slane %v1749, %v1793
        %1795 = vrot.lane.b32.xlu0 %v1794, 127
        %v1796 = vpop.permute.xlu0 %1795
        %v1798 = vadd.f32 %v1789, %v1796
        %v1799 = vsub.f32 0.0, %v1798
        %v1800 = vmul.f32 %v1799, 1.442695
        %v1801 = vpow.pop %v1800
        %v1802 = vadd.f32 %v1801, 1.0
        %v1803 = vrcp.pop %v1802
        %v1804 = vmul.f32 %v1798, %v1803
        %1806 = vset.pattern.permute.xlu0 0
        %1807 = vperm.xlu0 %1806, %v1804
        %v1808 = vpop.permute.xlu0 %1807
        %v1810 = vlaneseq
        %v1811 = vshrl.u32 %v1810, 7
        %v1812 = vsub.s32 1, %v1811
        %v1813 = vrot.slane %v1751, %v1812
        %v1814 = vlaneseq
        %v1815 = vshrl.u32 %v1814, 7
        %v1816 = vsub.s32 3, %v1815
        %v1817 = vrot.slane %v1751, %v1816
        %v1820 = vmul.f32 %v1808, %v1813
        %v1821 = vmul.f32 %v1808, %v1817
        %v1822 = vadd.f32 %v1781, %v1820
        %v1823 = vadd.f32 %v1782, %v1821
        %s1824 = scalar_lea.vmem %s9, 2
        %v1825 = vld [vmem:[%s1824] sm:$0x3]
        %v1827 = vlaneseq
        %v1828 = vshrl.u32 %v1827, 7
        %v1829 = vsub.s32 0, %v1828
        %v1830 = vrot.slane %v1825, %v1829
        %v1831 = vlaneseq
        %v1832 = vshrl.u32 %v1831, 7
        %v1833 = vsub.s32 1, %v1832
        %v1834 = vrot.slane %v1825, %v1833
        %v1837 = vadd.f32 %v1822, %v1830
        %v1838 = vadd.f32 %v1823, %v1834
        %v1839 = vsub.f32 0.0, %v1837
        %v1840 = vsub.f32 0.0, %v1838
        %v1841 = vmul.f32 %v1839, 1.442695
        %v1842 = vpow.pop %v1841
        %v1843 = vmul.f32 %v1840, 1.442695
        %v1844 = vpow.pop %v1843
        %v1845 = vadd.f32 %v1842, 1.0
        %v1846 = vadd.f32 %v1844, 1.0
        %v1847 = vrcp.pop %v1845
        %v1848 = vrcp.pop %v1846
        %v1849 = vlaneseq
        %v1850 = vshrl.u32 %v1849, 7
        %v1851 = vsub.s32 0, %v1850
        %v1852 = vrot.slane %v1847, %v1851
        %v1853 = vlaneseq
        %v1854 = vshrl.u32 %v1853, 7
        %v1855 = vsub.s32 0, %v1854
        %v1856 = vrot.slane %v1848, %v1855
        %v1857 = vmul.f32 %v1717, %v1852
        %v1858 = vmul.f32 %v1718, %v1856
        %v1859 = vmul.f32 %v1719, %v1852
        %v1860 = vmul.f32 %v1720, %v1856
        %v1861 = vpack.c.bf16 %v1859, %v1857
        %v1862 = vpack.c.bf16 %v1860, %v1858
        %s1863 = scalar_lea.vmem [#allocation5], 128
        %v1864 = vld [vmem:[%s1863] sm:$0xf]
        %v1865 = vld [vmem:[%s1863 + $0x4] sm:$0xf]
        %v1866 = vld [vmem:[%s1863 + $0x8] sm:$0xf]
        %v1867 = vld [vmem:[%s1863 + $0xc] sm:$0xf]
        %v1868 = vld [vmem:[%s1863 + $0x10] sm:$0xf]
        %v1869 = vld [vmem:[%s1863 + $0x14] sm:$0xf]
        %v1870 = vld [vmem:[%s1863 + $0x18] sm:$0xf]
        %v1871 = vld [vmem:[%s1863 + $0x1c] sm:$0xf]
        %v1872 = vld [vmem:[%s1863 + $0x20] sm:$0xf]
        %v1873 = vld [vmem:[%s1863 + $0x24] sm:$0xf]
        %v1874 = vld [vmem:[%s1863 + $0x28] sm:$0xf]
        %v1875 = vld [vmem:[%s1863 + $0x2c] sm:$0xf]
        %v1876 = vld [vmem:[%s1863 + $0x30] sm:$0xf]
        %v1877 = vld [vmem:[%s1863 + $0x34] sm:$0xf]
        %v1878 = vld [vmem:[%s1863 + $0x38] sm:$0xf]
        %v1879 = vld [vmem:[%s1863 + $0x3c] sm:$0xf]
        %v1880 = vld [vmem:[%s1863 + $0x40] sm:$0xf]
        %v1881 = vld [vmem:[%s1863 + $0x44] sm:$0xf]
        %v1882 = vld [vmem:[%s1863 + $0x48] sm:$0xf]
        %v1883 = vld [vmem:[%s1863 + $0x4c] sm:$0xf]
        %v1884 = vld [vmem:[%s1863 + $0x50] sm:$0xf]
        %v1885 = vld [vmem:[%s1863 + $0x54] sm:$0xf]
        %v1886 = vld [vmem:[%s1863 + $0x58] sm:$0xf]
        %v1887 = vld [vmem:[%s1863 + $0x5c] sm:$0xf]
        %v1888 = vld [vmem:[%s1863 + $0x60] sm:$0xf]
        %v1889 = vld [vmem:[%s1863 + $0x64] sm:$0xf]
        %v1890 = vld [vmem:[%s1863 + $0x68] sm:$0xf]
        %v1891 = vld [vmem:[%s1863 + $0x6c] sm:$0xf]
        %v1892 = vld [vmem:[%s1863 + $0x70] sm:$0xf]
        %v1893 = vld [vmem:[%s1863 + $0x74] sm:$0xf]
        %v1894 = vld [vmem:[%s1863 + $0x78] sm:$0xf]
        %v1895 = vld [vmem:[%s1863 + $0x7c] sm:$0xf]
        %s1896 = scalar_lea.vmem %s11, 1
        %v1897 = vld [vmem:[%s1896] sm:$0x1]
        %v1899 = vlaneseq
        %v1900 = vshrl.u32 %v1899, 7
        %v1901 = vsub.s32 0, %v1900
        %v1902 = vrot.slane %v1897, %v1901
        %v1936 = vunpack.c.l.b16 %v1864
        %v1937 = vunpack.c.l.b16 %v1865
        %v1938 = vunpack.c.l.b16 %v1866
        %v1939 = vunpack.c.l.b16 %v1867
        %v1940 = vunpack.c.l.b16 %v1868
        %v1941 = vunpack.c.l.b16 %v1869
        %v1942 = vunpack.c.l.b16 %v1870
        %v1943 = vunpack.c.l.b16 %v1871
        %v1944 = vunpack.c.l.b16 %v1872
        %v1945 = vunpack.c.l.b16 %v1873
        %v1946 = vunpack.c.l.b16 %v1874
        %v1947 = vunpack.c.l.b16 %v1875
        %v1948 = vunpack.c.l.b16 %v1876
        %v1949 = vunpack.c.l.b16 %v1877
        %v1950 = vunpack.c.l.b16 %v1878
        %v1951 = vunpack.c.l.b16 %v1879
        %v1952 = vunpack.c.l.b16 %v1880
        %v1953 = vunpack.c.l.b16 %v1881
        %v1954 = vunpack.c.l.b16 %v1882
        %v1955 = vunpack.c.l.b16 %v1883
        %v1956 = vunpack.c.l.b16 %v1884
        %v1957 = vunpack.c.l.b16 %v1885
        %v1958 = vunpack.c.l.b16 %v1886
        %v1959 = vunpack.c.l.b16 %v1887
        %v1960 = vunpack.c.l.b16 %v1888
        %v1961 = vunpack.c.l.b16 %v1889
        %v1962 = vunpack.c.l.b16 %v1890
        %v1963 = vunpack.c.l.b16 %v1891
        %v1964 = vunpack.c.l.b16 %v1892
        %v1965 = vunpack.c.l.b16 %v1893
        %v1966 = vunpack.c.l.b16 %v1894
        %v1967 = vunpack.c.l.b16 %v1895
        %v1968 = vpack.c.b16 %v1937, %v1936
        %v1969 = vpack.c.b16 %v1939, %v1938
        %v1970 = vpack.c.b16 %v1941, %v1940
        %v1971 = vpack.c.b16 %v1943, %v1942
        %v1972 = vpack.c.b16 %v1945, %v1944
        %v1973 = vpack.c.b16 %v1947, %v1946
        %v1974 = vpack.c.b16 %v1949, %v1948
        %v1975 = vpack.c.b16 %v1951, %v1950
        %v1976 = vpack.c.b16 %v1953, %v1952
        %v1977 = vpack.c.b16 %v1955, %v1954
        %v1978 = vpack.c.b16 %v1957, %v1956
        %v1979 = vpack.c.b16 %v1959, %v1958
        %v1980 = vpack.c.b16 %v1961, %v1960
        %v1981 = vpack.c.b16 %v1963, %v1962
        %v1982 = vpack.c.b16 %v1965, %v1964
        %v1983 = vpack.c.b16 %v1967, %v1966
        %2000 = vmatprep.subr.bf16.mxu0 0
        %2001 = vmatpush1.bf16.msra.mxu0 %v1968
        %2002 = vmatprep.subr.bf16.mxu0 0
        %2003 = vmatpush1.bf16.msra.mxu0 %v1969
        %2004 = vmatprep.subr.bf16.mxu0 0
        %2005 = vmatpush1.bf16.msra.mxu0 %v1970
        %2006 = vmatprep.subr.bf16.mxu0 0
        %2007 = vmatpush1.bf16.msra.mxu0 %v1971
        %2008 = vmatprep.subr.bf16.mxu0 0
        %2009 = vmatpush1.bf16.msra.mxu0 %v1972
        %2010 = vmatprep.subr.bf16.mxu0 0
        %2011 = vmatpush1.bf16.msra.mxu0 %v1973
        %2012 = vmatprep.subr.bf16.mxu0 0
        %2013 = vmatpush1.bf16.msra.mxu0 %v1974
        %2014 = vmatprep.subr.bf16.mxu0 0
        %2015 = vmatpush1.bf16.msra.mxu0 %v1975
        %2016 = vmatprep.subr.bf16.mxu0 0
        %2017 = vmatpush1.bf16.msra.mxu0 %v1976
        %2018 = vmatprep.subr.bf16.mxu0 0
        %2019 = vmatpush1.bf16.msra.mxu0 %v1977
        %2020 = vmatprep.subr.bf16.mxu0 0
        %2021 = vmatpush1.bf16.msra.mxu0 %v1978
        %2022 = vmatprep.subr.bf16.mxu0 0
        %2023 = vmatpush1.bf16.msra.mxu0 %v1979
        %2024 = vmatprep.subr.bf16.mxu0 0
        %2025 = vmatpush1.bf16.msra.mxu0 %v1980
        %2026 = vmatprep.subr.bf16.mxu0 0
        %2027 = vmatpush1.bf16.msra.mxu0 %v1981
        %2028 = vmatprep.subr.bf16.mxu0 0
        %2029 = vmatpush1.bf16.msra.mxu0 %v1982
        %2030 = vmatprep.subr.bf16.mxu0 0
        %2031 = vmatpush1.bf16.msra.mxu0 %v1983
        %2032 = vmatprep.mubr.bf16.mxu0 %v1862
        %2033 = vmatmul.mubr.bf16.gmra.mrb[0].mxu0 %v1861
        %v2034 = vpop.f32.mrb[0].mxu0
        %v2035 = vadd.f32 %v1902, %v2034
        %v2036 = vpop.f32.mrb[0].mxu0
        %v2037 = vpop.f32.mrb[0].mxu0
        %v2038 = vadd.f32 %v1902, %v2037
        %v2039 = vpop.f32.mrb[0].mxu0
        %2040 = vdwg.mxu0
        %v2041 = vsub.f32 0.0, %v2035
        %v2042 = vsub.f32 0.0, %v2038
        %v2043 = vmul.f32 %v2041, 1.442695
        %v2044 = vpow.pop %v2043
        %v2045 = vmul.f32 %v2042, 1.442695
        %v2046 = vpow.pop %v2045
        %v2047 = vadd.f32 %v2044, 1.0
        %v2048 = vadd.f32 %v2046, 1.0
        %v2049 = vrcp.pop %v2047
        %v2050 = vrcp.pop %v2048
        %v2051 = vmul.f32 %v2035, %v2049
        %v2052 = vmul.f32 %v2038, %v2050
        %v2053 = vadd.f32 %v2051, %v1259
        %v2054 = vadd.f32 %v2052, %v1260
        %2055 = vst [vmem:[%s437] sm:$0xff] %v2053
        %2056 = vst [vmem:[%s437 + $0x8] sm:$0xff] %v2054
        %s2057 = sand.u32 %s293, 1
        %s2058 = scalar_lea.sflag [#allocation4], %s2057
        %s2059 = sand.u32 %s293, 1
        %s2060 = smul.addr %s2059, 16
        %s2061 = scalar_lea.vmem [#allocation7], %s2060
        // Predicated region
        $region77: #{tpu_custom_call.1} parent=67 // pred_check
          %p2062 = pneg %p303
        $region78: #{tpu_custom_call.1} parent=67 // pred_check_branch
          %2064 = sbr.rel (%p2062) target = $region80
        $region79: #{tpu_custom_call.1} parent=67 // pred_region
          %s2065 = smul.u32 2, %s28
          %s2067 = ssub.s32 256, 256
          %2068 = vsyncadd %s2058, %s2067
          %s2069 = smul.addr %s2065, 128
          %s2070 = scalar_lea.hbm %s12, %s2069
          %s2071 = sshll.u32 %s2061, 4
          %s2072 = int_to_ptr.vmem [resolvable:$true] %s2071
          %2077 = dma.vmem_to_hbm [thread:$0]  %s2072, 256, %s2070, %s2058, 128, 128, 8
        $region80: #{tpu_custom_call.1} parent=67 // pred_fallthru
          _
      $region68: #{tpu_custom_call.1} parent=5 // pred_fallthru
        _
      %p2078 = scmp.le.s32.totalorder 2, %s23
      // Predicated region
      $region81: #{tpu_custom_call.1} parent=5 // pred_check
        %p2079 = pneg %p2078
      $region82: #{tpu_custom_call.1} parent=5 // pred_check_branch
        %2081 = sbr.rel (%p2079) target = $region84
      $region83: #{tpu_custom_call.1} parent=5 // pred_region
        %s2082 = ssub.s32 %s23, 2
        // Predicated region
        $region85: #{tpu_custom_call.1} parent=83 // pred_check
          %p2083 = pneg %p309
        $region86: #{tpu_custom_call.1} parent=83 // pred_check_branch
          %2085 = sbr.rel (%p2083) target = $region88
        $region87: #{tpu_custom_call.1} parent=83 // pred_region
          %s2086 = sand.u32 %s294, 1
          %s2087 = scalar_lea.sflag [#allocation4], %s2086
          %s2088 = sand.u32 %s294, 1
          %s2089 = smul.addr %s2088, 16
          %s2090 = scalar_lea.vmem [#allocation7], %s2089
          %2091 = dma.done %s2087, 256
        $region88: #{tpu_custom_call.1} parent=83 // pred_fallthru
          _
      $region84: #{tpu_custom_call.1} parent=5 // pred_fallthru
        _
    $region6: #{tpu_custom_call.1} parent=1 // loop_footer
      %s27 = sadd.s32 1, %s23
    $region7: #{tpu_custom_call.1} parent=1 // loop_footer_branch
      %22 = sbr.rel target = $region3
    $region8: #{tpu_custom_call.1} parent=1 // loop_exit
      _
    %2092 = vsyncpa [#allocation3], 1
    %s2093 = scalar_lea.sflag [#allocation3], 1
    %2094 = vsyncpa %s2093, 1
    %2095 = vsyncpa [#allocation6], 1
    %2096 = vsyncpa [#allocation4], 1
    %s2097 = scalar_lea.sflag [#allocation4], 1
    %2098 = vsyncpa %s2097, 1

</llo_original>
